<compile_context>
chip_gen: v7x
topology: tpu7x:2x2x1
jax: 0.10.0
libtpu: 0.0.40
codegen_flags: <defaults>
</compile_context>

<pallas_src>
import functools

import jax
import jax.numpy as jnp
from jax.experimental import pallas as pl
from jax.experimental.pallas import tpu as pltpu

NUM_LAYERS = 3
BN_EPS = 1e-5


def _structure_extractor_kernel(adj_ref, x_ref, w_ref, b_ref, weff_ref, beff_ref, out_ref):
    g, n, d = x_ref.shape            # graphs per block, nodes per graph, embed dim (static)
    gn = g * n
    num_layers = w_ref.shape[0]

    adj = adj_ref[...]               # [GN, GN] bf16 block-diagonal adjacency (MXU operand)
    x = x_ref[...]                   # [G, N, D] f32
    segments = [x]
    x_bf = x.reshape(gn, d).astype(jnp.bfloat16)

    for l in range(num_layers):
        # GCNConv: lin -> propagate -> bias, then ReLU.
        # X @ W_l flattened across graphs: one (GN, D) @ (D, D) bf16 MXU matmul.
        xw = jnp.dot(x_bf, w_ref[l], preferred_element_type=jnp.float32)       # [GN, D] f32
        # Aggregation as ONE block-diagonal matmul (contraction depth GN instead of N).
        agg = jnp.dot(adj, xw.astype(jnp.bfloat16),
                      preferred_element_type=jnp.float32)                      # [GN, D] f32
        x = jnp.maximum(agg.reshape(g, n, d) + b_ref[l].reshape(1, 1, d), 0.0)  # f32 VPU
        x_bf = x.reshape(gn, d).astype(jnp.bfloat16)
        segments.append(x)

    # BatchNorm1d per graph / per segment (BN stats are per-feature, so each D-wide segment is
    # normalized independently), then re-concat the normalized segments into one
    # (GN, (L+1)*D) bf16 slab and project with a single 128-deep matmul:
    #   out = concat_l(xhat_l) @ (diag(gamma) @ W_out) + (beta @ W_out + b_out)
    inv_n = 1.0 / float(n)
    norm_segs = []
    for seg in segments:
        s1 = jnp.sum(seg, axis=1, keepdims=True)                 # single pass: E[x], E[x^2]
        s2 = jnp.sum(seg * seg, axis=1, keepdims=True)
        mean = s1 * inv_n                                        # [G, 1, D]
        var = jnp.maximum(s2 * inv_n - mean * mean, 0.0)         # biased + clamped (no NaN)
        xhat = (seg - mean) * jax.lax.rsqrt(var + BN_EPS)        # [G, N, D] f32
        norm_segs.append(xhat.reshape(gn, d).astype(jnp.bfloat16))
    xcat = jnp.concatenate(norm_segs, axis=-1)                   # [GN, (L+1)*D] bf16
    out = jnp.dot(xcat, weff_ref[...], preferred_element_type=jnp.float32) + beff_ref[...]
    out_ref[...] = out.reshape(g, n, d).astype(out_ref.dtype)    # unpadded (full-extent D)


def _pick_graphs_per_block(batch, n):
    """G*N ~ 256 on v6e (2x256 MXU), ~128 on v5e/v7x (128-wide MXU passes; keeps >=2 grid
    steps for the 2 v7x TensorCores at small B). Falls back to the 128-row target."""
    try:
        kind = jax.devices()[0].device_kind.lower()
    except Exception:
        kind = ""
    target_rows = 256 if "v6" in kind else 128
    g = max(1, min(batch, target_rows // max(n, 1)))
    while g > 1 and batch % g != 0:
        g -= 1
    return g


def fold_params(w_stack, b_stack, gamma, beta, w_out, b_out):
    """One-time weight preparation, hoisted out of the per-call hot path:
    BN affine folded into the projection, MXU operands pre-cast to bf16."""
    num_layers, d, _ = w_stack.shape
    inner = (num_layers + 1) * d
    assert gamma.shape == (1, inner) and w_out.shape == (inner, d)
    w_eff = (gamma.reshape(inner, 1) * w_out).astype(jnp.bfloat16)   # diag(gamma) @ W_out
    b_eff = (b_out + beta @ w_out).astype(jnp.float32)               # beta @ W_out + b_out
    return (w_stack.astype(jnp.bfloat16), b_stack.astype(jnp.float32), w_eff, b_eff)


@functools.partial(jax.jit, static_argnames=("graphs_per_block",))
def structure_extractor(adj_norm, x, w_bf, b_f32, w_eff, b_eff, *, graphs_per_block=None):
    """B independent StructureExtractor forwards batched into one Pallas kernel.

    adj_norm: [B,N,N], x: [B,N,D], (w_bf, b_f32, w_eff, b_eff) from fold_params -> [B,N,D]
    """
    batch, n, d = x.shape
    num_layers = w_bf.shape[0]
    inner = (num_layers + 1) * d
    assert w_eff.shape == (inner, d) and b_eff.shape == (1, d)

    g = graphs_per_block if graphs_per_block is not None else _pick_graphs_per_block(batch, n)
    assert batch % g == 0, "batch must be divisible by graphs_per_block"
    nb = batch // g
    gn = g * n

    # Block-diagonal adjacency per group of g graphs (bf16).  Under jit the cast and the
    # block-diag build fuse; at toy N the (GN, GN) block is tiny (<=128 KiB).
    adj_g = adj_norm.astype(jnp.bfloat16).reshape(nb, g, n, n)
    eye_g = jnp.eye(g, dtype=jnp.bfloat16)
    adj_bd = jnp.einsum('bgij,gh->bgihj', adj_g, eye_g).reshape(nb * gn, gn)

    return pl.pallas_call(
        _structure_extractor_kernel,
        out_shape=jax.ShapeDtypeStruct((batch, n, d), jnp.float32),
        grid_spec=pltpu.PrefetchScalarGridSpec(
            num_scalar_prefetch=0,
            grid=(nb,),
            in_specs=[
                pl.BlockSpec((gn, gn), lambda i: (i, 0)),               # block-diag adj (bf16)
                pl.BlockSpec((g, n, d), lambda i: (i, 0, 0)),           # x (f32)
                pl.BlockSpec((num_layers, d, d), lambda i: (0, 0, 0)),  # W_l (bf16, shared)
                pl.BlockSpec((num_layers, 1, d), lambda i: (0, 0, 0)),  # b_l (f32, shared)
                pl.BlockSpec((inner, d), lambda i: (0, 0)),             # gamma-folded W_out (bf16)
                pl.BlockSpec((1, d), lambda i: (0, 0)),                 # folded bias (f32)
            ],
            out_specs=pl.BlockSpec((g, n, d), lambda i: (i, 0, 0)),     # unpadded output
        ),
        compiler_params=pltpu.CompilerParams(
            # Batch axis shards across the 2 TensorCores on v7x; serial loop on v5e/v6e.
            dimension_semantics=("parallel",),
            # Per-step footprint here is < 1 MiB, so the default scoped VMEM limit is ample.
            # For non-toy N: tile the adjacency contraction and cap ~48 MiB on v7x (64 MiB
            # physical); on v5e/v6e raise toward ~96 MiB instead of shrinking tiles.
        ),
    )(adj_bd, x.astype(jnp.float32), w_bf, b_f32, w_eff, b_eff)


def random_gcn_adjacency(key, batch, num_nodes):
    """Batched dense GCN-normalized adjacency D^-1/2 (A + I) D^-1/2 for random
    undirected graphs (plain-JAX glue, deterministic given the key)."""
    m = jax.random.bernoulli(key, 0.25, (batch, num_nodes, num_nodes))
    a = jnp.maximum(m, jnp.swapaxes(m, -1, -2)).astype(jnp.float32)   # symmetrize
    eye = jnp.eye(num_nodes, dtype=jnp.float32)
    a = a * (1.0 - eye) + eye                                          # self loops
    deg = jnp.sum(a, axis=-1)                                          # >= 1
    dinv = jax.lax.rsqrt(deg)
    return dinv[:, :, None] * a * dinv[:, None, :]


def reference_forward(adj_norm, x, w_stack, b_stack, gamma, beta, w_out, b_out):
    """Pure-JAX f32 reference: the PyTorch module forward applied independently per graph."""
    def one_graph(a, xg):
        xs = [xg]
        h = xg
        for li in range(w_stack.shape[0]):
            h = jnp.maximum(a @ (h @ w_stack[li]) + b_stack[li], 0.0)
            xs.append(h)
        xc = jnp.concatenate(xs, axis=-1)
        mean = jnp.mean(xc, axis=0, keepdims=True)
        var = jnp.mean((xc - mean) ** 2, axis=0, keepdims=True)
        xn = (xc - mean) * jax.lax.rsqrt(var + BN_EPS) * gamma + beta
        return xn @ w_out + b_out
    return jax.vmap(one_graph)(adj_norm, x)


if __name__ == "__main__":
    key = jax.random.PRNGKey(0)
    B, N, D = 16, 16, 32          # 16 graphs x 16 nodes x embed_dim 32
    L = NUM_LAYERS
    INNER = (L + 1) * D

    k_adj, k_x, k_w, k_b, k_g, k_bt, k_wo = jax.random.split(key, 7)

    # Adjacency kept in bf16 at its producer (hoists the cast out of the forward hot path).
    adj_norm_bf = random_gcn_adjacency(k_adj, B, N).astype(jnp.bfloat16)   # [B, N, N]
    x = jax.random.normal(k_x, (B, N, D), jnp.float32)                     # [B, N, D]

    w_stack = jax.random.normal(k_w, (L, D, D), jnp.float32) * (1.0 / jnp.sqrt(D))
    b_stack = 0.01 * jax.random.normal(k_b, (L, 1, D), jnp.float32)
    gamma = 1.0 + 0.1 * jax.random.normal(k_g, (1, INNER), jnp.float32)    # BatchNorm1d weight
    beta = 0.1 * jax.random.normal(k_bt, (1, INNER), jnp.float32)          # BatchNorm1d bias
    w_out = jax.random.normal(k_wo, (INNER, D), jnp.float32) * (1.0 / jnp.sqrt(INNER))
    b_out = jnp.zeros((1, D), jnp.float32)

    folded = fold_params(w_stack, b_stack, gamma, beta, w_out, b_out)      # one-time prep
    out = structure_extractor(adj_norm_bf, x, *folded)
    out = jax.block_until_ready(out)
    assert out.shape == (B, N, D)
    assert bool(jnp.isfinite(out).all())

    ref = reference_forward(adj_norm_bf.astype(jnp.float32), x, w_stack, b_stack,
                            gamma, beta, w_out, b_out)
    err = float(jnp.max(jnp.abs(out - ref)))
    scale = 1.0 + float(jnp.max(jnp.abs(ref)))
    assert err <= 0.05 * scale, f"max abs err {err} vs ref scale {scale}"
    print("KERNEL_OK")
</pallas_src>

<mosaic_0001>
module attributes {stable_mosaic.version = 11 : i64} {
  func.func @_structure_extractor_kernel(%arg0: i32, %arg1: memref<128x128xbf16, #tpu.memory_space<vmem>>, %arg2: memref<8x16x32xf32, #tpu.memory_space<vmem>>, %arg3: memref<3x32x32xbf16, #tpu.memory_space<vmem>>, %arg4: memref<3x1x32xf32, #tpu.memory_space<vmem>>, %arg5: memref<128x32xbf16, #tpu.memory_space<vmem>>, %arg6: memref<1x32xf32, #tpu.memory_space<vmem>>, %arg7: memref<8x16x32xf32, #tpu.memory_space<vmem>>) attributes {dimension_semantics = [#tpu.dimension_semantics<parallel>], iteration_bounds = array<i64: 2>, scalar_prefetch = 0 : i64, scratch_operands = 0 : i64, tpu.core_type = #tpu.core_type<tc>, window_params = [{transform_indices = @transform_0, window_bounds = array<i64: 128, 128>}, {transform_indices = @transform_1, window_bounds = array<i64: 8, 16, 32>}, {pipeline_mode = #tpu.pipeline_mode<synchronous>, transform_indices = @transform_2, window_bounds = array<i64: 3, 32, 32>}, {pipeline_mode = #tpu.pipeline_mode<synchronous>, transform_indices = @transform_3, window_bounds = array<i64: 3, 1, 32>}, {pipeline_mode = #tpu.pipeline_mode<synchronous>, transform_indices = @transform_4, window_bounds = array<i64: 128, 32>}, {pipeline_mode = #tpu.pipeline_mode<synchronous>, transform_indices = @transform_5, window_bounds = array<i64: 1, 32>}, {transform_indices = @transform_6, window_bounds = array<i64: 8, 16, 32>}]} {
    %c0 = arith.constant 0 : index
    %c0_0 = arith.constant 0 : index
    %0 = vector.load %arg1[%c0, %c0_0] : memref<128x128xbf16, #tpu.memory_space<vmem>>, vector<128x128xbf16>
    %c0_1 = arith.constant 0 : index
    %c0_2 = arith.constant 0 : index
    %c0_3 = arith.constant 0 : index
    %1 = vector.load %arg2[%c0_1, %c0_2, %c0_3] : memref<8x16x32xf32, #tpu.memory_space<vmem>>, vector<8x16x32xf32>
    %2 = vector.shape_cast %1 : vector<8x16x32xf32> to vector<128x32xf32>
    %3 = arith.truncf %2 : vector<128x32xf32> to vector<128x32xbf16>
    %c0_4 = arith.constant 0 : index
    %c0_5 = arith.constant 0 : index
    %c0_6 = arith.constant 0 : index
    %4 = vector.load %arg3[%c0_4, %c0_5, %c0_6] : memref<3x32x32xbf16, #tpu.memory_space<vmem>>, vector<1x32x32xbf16>
    %5 = vector.shape_cast %4 : vector<1x32x32xbf16> to vector<32x32xbf16>
    %cst = arith.constant dense<0.000000e+00> : vector<128x32xf32>
    %6 = tpu.matmul %3, %5, %cst {dimension_numbers = #tpu.dot_dimension_numbers<[1], [0], [0], [1], [0, 0, 1, 1], [], []>} : vector<128x32xbf16>, vector<32x32xbf16>, vector<128x32xf32> -> vector<128x32xf32>
    %7 = arith.truncf %6 : vector<128x32xf32> to vector<128x32xbf16>
    %cst_7 = arith.constant dense<0.000000e+00> : vector<128x32xf32>
    %8 = tpu.matmul %0, %7, %cst_7 {dimension_numbers = #tpu.dot_dimension_numbers<[1], [0], [0], [1], [0, 0, 1, 1], [], []>} : vector<128x128xbf16>, vector<128x32xbf16>, vector<128x32xf32> -> vector<128x32xf32>
    %9 = vector.shape_cast %8 : vector<128x32xf32> to vector<8x16x32xf32>
    %c0_8 = arith.constant 0 : index
    %c0_9 = arith.constant 0 : index
    %c0_10 = arith.constant 0 : index
    %10 = vector.load %arg4[%c0_8, %c0_9, %c0_10] : memref<3x1x32xf32, #tpu.memory_space<vmem>>, vector<1x1x32xf32>
    %11 = vector.shape_cast %10 : vector<1x1x32xf32> to vector<1x32xf32>
    %12 = vector.shape_cast %11 : vector<1x32xf32> to vector<1x1x32xf32>
    %13 = vector.broadcast %12 : vector<1x1x32xf32> to vector<8x16x32xf32>
    %14 = arith.addf %9, %13 : vector<8x16x32xf32>
    %cst_11 = arith.constant 0.000000e+00 : f32
    %15 = vector.broadcast %cst_11 : f32 to vector<8x16x32xf32>
    %16 = arith.maximumf %14, %15 : vector<8x16x32xf32>
    %17 = vector.shape_cast %16 : vector<8x16x32xf32> to vector<128x32xf32>
    %18 = arith.truncf %17 : vector<128x32xf32> to vector<128x32xbf16>
    %c1 = arith.constant 1 : index
    %c0_12 = arith.constant 0 : index
    %c0_13 = arith.constant 0 : index
    %19 = vector.load %arg3[%c1, %c0_12, %c0_13] : memref<3x32x32xbf16, #tpu.memory_space<vmem>>, vector<1x32x32xbf16>
    %20 = vector.shape_cast %19 : vector<1x32x32xbf16> to vector<32x32xbf16>
    %cst_14 = arith.constant dense<0.000000e+00> : vector<128x32xf32>
    %21 = tpu.matmul %18, %20, %cst_14 {dimension_numbers = #tpu.dot_dimension_numbers<[1], [0], [0], [1], [0, 0, 1, 1], [], []>} : vector<128x32xbf16>, vector<32x32xbf16>, vector<128x32xf32> -> vector<128x32xf32>
    %22 = arith.truncf %21 : vector<128x32xf32> to vector<128x32xbf16>
    %cst_15 = arith.constant dense<0.000000e+00> : vector<128x32xf32>
    %23 = tpu.matmul %0, %22, %cst_15 {dimension_numbers = #tpu.dot_dimension_numbers<[1], [0], [0], [1], [0, 0, 1, 1], [], []>} : vector<128x128xbf16>, vector<128x32xbf16>, vector<128x32xf32> -> vector<128x32xf32>
    %24 = vector.shape_cast %23 : vector<128x32xf32> to vector<8x16x32xf32>
    %c1_16 = arith.constant 1 : index
    %c0_17 = arith.constant 0 : index
    %c0_18 = arith.constant 0 : index
    %25 = vector.load %arg4[%c1_16, %c0_17, %c0_18] : memref<3x1x32xf32, #tpu.memory_space<vmem>>, vector<1x1x32xf32>
    %26 = vector.shape_cast %25 : vector<1x1x32xf32> to vector<1x32xf32>
    %27 = vector.shape_cast %26 : vector<1x32xf32> to vector<1x1x32xf32>
    %28 = vector.broadcast %27 : vector<1x1x32xf32> to vector<8x16x32xf32>
    %29 = arith.addf %24, %28 : vector<8x16x32xf32>
    %cst_19 = arith.constant 0.000000e+00 : f32
    %30 = vector.broadcast %cst_19 : f32 to vector<8x16x32xf32>
    %31 = arith.maximumf %29, %30 : vector<8x16x32xf32>
    %32 = vector.shape_cast %31 : vector<8x16x32xf32> to vector<128x32xf32>
    %33 = arith.truncf %32 : vector<128x32xf32> to vector<128x32xbf16>
    %c2 = arith.constant 2 : index
    %c0_20 = arith.constant 0 : index
    %c0_21 = arith.constant 0 : index
    %34 = vector.load %arg3[%c2, %c0_20, %c0_21] : memref<3x32x32xbf16, #tpu.memory_space<vmem>>, vector<1x32x32xbf16>
    %35 = vector.shape_cast %34 : vector<1x32x32xbf16> to vector<32x32xbf16>
    %cst_22 = arith.constant dense<0.000000e+00> : vector<128x32xf32>
    %36 = tpu.matmul %33, %35, %cst_22 {dimension_numbers = #tpu.dot_dimension_numbers<[1], [0], [0], [1], [0, 0, 1, 1], [], []>} : vector<128x32xbf16>, vector<32x32xbf16>, vector<128x32xf32> -> vector<128x32xf32>
    %37 = arith.truncf %36 : vector<128x32xf32> to vector<128x32xbf16>
    %cst_23 = arith.constant dense<0.000000e+00> : vector<128x32xf32>
    %38 = tpu.matmul %0, %37, %cst_23 {dimension_numbers = #tpu.dot_dimension_numbers<[1], [0], [0], [1], [0, 0, 1, 1], [], []>} : vector<128x128xbf16>, vector<128x32xbf16>, vector<128x32xf32> -> vector<128x32xf32>
    %39 = vector.shape_cast %38 : vector<128x32xf32> to vector<8x16x32xf32>
    %c2_24 = arith.constant 2 : index
    %c0_25 = arith.constant 0 : index
    %c0_26 = arith.constant 0 : index
    %40 = vector.load %arg4[%c2_24, %c0_25, %c0_26] : memref<3x1x32xf32, #tpu.memory_space<vmem>>, vector<1x1x32xf32>
    %41 = vector.shape_cast %40 : vector<1x1x32xf32> to vector<1x32xf32>
    %42 = vector.shape_cast %41 : vector<1x32xf32> to vector<1x1x32xf32>
    %43 = vector.broadcast %42 : vector<1x1x32xf32> to vector<8x16x32xf32>
    %44 = arith.addf %39, %43 : vector<8x16x32xf32>
    %cst_27 = arith.constant 0.000000e+00 : f32
    %45 = vector.broadcast %cst_27 : f32 to vector<8x16x32xf32>
    %46 = arith.maximumf %44, %45 : vector<8x16x32xf32>
    %cst_28 = arith.constant dense<0.000000e+00> : vector<8x32xf32>
    %47 = vector.multi_reduction <add>, %1, %cst_28 [1] : vector<8x16x32xf32> to vector<8x32xf32>
    %48 = vector.shape_cast %47 : vector<8x32xf32> to vector<8x1x32xf32>
    %49 = arith.mulf %1, %1 : vector<8x16x32xf32>
    %cst_29 = arith.constant dense<0.000000e+00> : vector<8x32xf32>
    %50 = vector.multi_reduction <add>, %49, %cst_29 [1] : vector<8x16x32xf32> to vector<8x32xf32>
    %51 = vector.shape_cast %50 : vector<8x32xf32> to vector<8x1x32xf32>
    %cst_30 = arith.constant 6.250000e-02 : f32
    %52 = vector.broadcast %cst_30 : f32 to vector<8x1x32xf32>
    %53 = arith.mulf %48, %52 : vector<8x1x32xf32>
    %cst_31 = arith.constant 6.250000e-02 : f32
    %54 = vector.broadcast %cst_31 : f32 to vector<8x1x32xf32>
    %55 = arith.mulf %51, %54 : vector<8x1x32xf32>
    %56 = arith.mulf %53, %53 : vector<8x1x32xf32>
    %57 = arith.subf %55, %56 : vector<8x1x32xf32>
    %cst_32 = arith.constant 0.000000e+00 : f32
    %58 = vector.broadcast %cst_32 : f32 to vector<8x1x32xf32>
    %59 = arith.maximumf %57, %58 : vector<8x1x32xf32>
    %60 = vector.broadcast %53 : vector<8x1x32xf32> to vector<8x16x32xf32>
    %61 = arith.subf %1, %60 : vector<8x16x32xf32>
    %cst_33 = arith.constant 9.99999974E-6 : f32
    %62 = vector.broadcast %cst_33 : f32 to vector<8x1x32xf32>
    %63 = arith.addf %59, %62 : vector<8x1x32xf32>
    %64 = math.rsqrt %63 : vector<8x1x32xf32>
    %65 = vector.broadcast %64 : vector<8x1x32xf32> to vector<8x16x32xf32>
    %66 = arith.mulf %61, %65 : vector<8x16x32xf32>
    %67 = vector.shape_cast %66 : vector<8x16x32xf32> to vector<128x32xf32>
    %68 = arith.truncf %67 : vector<128x32xf32> to vector<128x32xbf16>
    %cst_34 = arith.constant dense<0.000000e+00> : vector<8x32xf32>
    %69 = vector.multi_reduction <add>, %16, %cst_34 [1] : vector<8x16x32xf32> to vector<8x32xf32>
    %70 = vector.shape_cast %69 : vector<8x32xf32> to vector<8x1x32xf32>
    %71 = arith.mulf %16, %16 : vector<8x16x32xf32>
    %cst_35 = arith.constant dense<0.000000e+00> : vector<8x32xf32>
    %72 = vector.multi_reduction <add>, %71, %cst_35 [1] : vector<8x16x32xf32> to vector<8x32xf32>
    %73 = vector.shape_cast %72 : vector<8x32xf32> to vector<8x1x32xf32>
    %cst_36 = arith.constant 6.250000e-02 : f32
    %74 = vector.broadcast %cst_36 : f32 to vector<8x1x32xf32>
    %75 = arith.mulf %70, %74 : vector<8x1x32xf32>
    %cst_37 = arith.constant 6.250000e-02 : f32
    %76 = vector.broadcast %cst_37 : f32 to vector<8x1x32xf32>
    %77 = arith.mulf %73, %76 : vector<8x1x32xf32>
    %78 = arith.mulf %75, %75 : vector<8x1x32xf32>
    %79 = arith.subf %77, %78 : vector<8x1x32xf32>
    %cst_38 = arith.constant 0.000000e+00 : f32
    %80 = vector.broadcast %cst_38 : f32 to vector<8x1x32xf32>
    %81 = arith.maximumf %79, %80 : vector<8x1x32xf32>
    %82 = vector.broadcast %75 : vector<8x1x32xf32> to vector<8x16x32xf32>
    %83 = arith.subf %16, %82 : vector<8x16x32xf32>
    %cst_39 = arith.constant 9.99999974E-6 : f32
    %84 = vector.broadcast %cst_39 : f32 to vector<8x1x32xf32>
    %85 = arith.addf %81, %84 : vector<8x1x32xf32>
    %86 = math.rsqrt %85 : vector<8x1x32xf32>
    %87 = vector.broadcast %86 : vector<8x1x32xf32> to vector<8x16x32xf32>
    %88 = arith.mulf %83, %87 : vector<8x16x32xf32>
    %89 = vector.shape_cast %88 : vector<8x16x32xf32> to vector<128x32xf32>
    %90 = arith.truncf %89 : vector<128x32xf32> to vector<128x32xbf16>
    %cst_40 = arith.constant dense<0.000000e+00> : vector<8x32xf32>
    %91 = vector.multi_reduction <add>, %31, %cst_40 [1] : vector<8x16x32xf32> to vector<8x32xf32>
    %92 = vector.shape_cast %91 : vector<8x32xf32> to vector<8x1x32xf32>
    %93 = arith.mulf %31, %31 : vector<8x16x32xf32>
    %cst_41 = arith.constant dense<0.000000e+00> : vector<8x32xf32>
    %94 = vector.multi_reduction <add>, %93, %cst_41 [1] : vector<8x16x32xf32> to vector<8x32xf32>
    %95 = vector.shape_cast %94 : vector<8x32xf32> to vector<8x1x32xf32>
    %cst_42 = arith.constant 6.250000e-02 : f32
    %96 = vector.broadcast %cst_42 : f32 to vector<8x1x32xf32>
    %97 = arith.mulf %92, %96 : vector<8x1x32xf32>
    %cst_43 = arith.constant 6.250000e-02 : f32
    %98 = vector.broadcast %cst_43 : f32 to vector<8x1x32xf32>
    %99 = arith.mulf %95, %98 : vector<8x1x32xf32>
    %100 = arith.mulf %97, %97 : vector<8x1x32xf32>
    %101 = arith.subf %99, %100 : vector<8x1x32xf32>
    %cst_44 = arith.constant 0.000000e+00 : f32
    %102 = vector.broadcast %cst_44 : f32 to vector<8x1x32xf32>
    %103 = arith.maximumf %101, %102 : vector<8x1x32xf32>
    %104 = vector.broadcast %97 : vector<8x1x32xf32> to vector<8x16x32xf32>
    %105 = arith.subf %31, %104 : vector<8x16x32xf32>
    %cst_45 = arith.constant 9.99999974E-6 : f32
    %106 = vector.broadcast %cst_45 : f32 to vector<8x1x32xf32>
    %107 = arith.addf %103, %106 : vector<8x1x32xf32>
    %108 = math.rsqrt %107 : vector<8x1x32xf32>
    %109 = vector.broadcast %108 : vector<8x1x32xf32> to vector<8x16x32xf32>
    %110 = arith.mulf %105, %109 : vector<8x16x32xf32>
    %111 = vector.shape_cast %110 : vector<8x16x32xf32> to vector<128x32xf32>
    %112 = arith.truncf %111 : vector<128x32xf32> to vector<128x32xbf16>
    %cst_46 = arith.constant dense<0.000000e+00> : vector<8x32xf32>
    %113 = vector.multi_reduction <add>, %46, %cst_46 [1] : vector<8x16x32xf32> to vector<8x32xf32>
    %114 = vector.shape_cast %113 : vector<8x32xf32> to vector<8x1x32xf32>
    %115 = arith.mulf %46, %46 : vector<8x16x32xf32>
    %cst_47 = arith.constant dense<0.000000e+00> : vector<8x32xf32>
    %116 = vector.multi_reduction <add>, %115, %cst_47 [1] : vector<8x16x32xf32> to vector<8x32xf32>
    %117 = vector.shape_cast %116 : vector<8x32xf32> to vector<8x1x32xf32>
    %cst_48 = arith.constant 6.250000e-02 : f32
    %118 = vector.broadcast %cst_48 : f32 to vector<8x1x32xf32>
    %119 = arith.mulf %114, %118 : vector<8x1x32xf32>
    %cst_49 = arith.constant 6.250000e-02 : f32
    %120 = vector.broadcast %cst_49 : f32 to vector<8x1x32xf32>
    %121 = arith.mulf %117, %120 : vector<8x1x32xf32>
    %122 = arith.mulf %119, %119 : vector<8x1x32xf32>
    %123 = arith.subf %121, %122 : vector<8x1x32xf32>
    %cst_50 = arith.constant 0.000000e+00 : f32
    %124 = vector.broadcast %cst_50 : f32 to vector<8x1x32xf32>
    %125 = arith.maximumf %123, %124 : vector<8x1x32xf32>
    %126 = vector.broadcast %119 : vector<8x1x32xf32> to vector<8x16x32xf32>
    %127 = arith.subf %46, %126 : vector<8x16x32xf32>
    %cst_51 = arith.constant 9.99999974E-6 : f32
    %128 = vector.broadcast %cst_51 : f32 to vector<8x1x32xf32>
    %129 = arith.addf %125, %128 : vector<8x1x32xf32>
    %130 = math.rsqrt %129 : vector<8x1x32xf32>
    %131 = vector.broadcast %130 : vector<8x1x32xf32> to vector<8x16x32xf32>
    %132 = arith.mulf %127, %131 : vector<8x16x32xf32>
    %133 = vector.shape_cast %132 : vector<8x16x32xf32> to vector<128x32xf32>
    %134 = arith.truncf %133 : vector<128x32xf32> to vector<128x32xbf16>
    %135 = tpu.concatenate %68, %90, %112, %134 in 1 : vector<128x32xbf16>, vector<128x32xbf16>, vector<128x32xbf16>, vector<128x32xbf16> -> vector<128x128xbf16>
    %c0_52 = arith.constant 0 : index
    %c0_53 = arith.constant 0 : index
    %136 = vector.load %arg5[%c0_52, %c0_53] : memref<128x32xbf16, #tpu.memory_space<vmem>>, vector<128x32xbf16>
    %cst_54 = arith.constant dense<0.000000e+00> : vector<128x32xf32>
    %137 = tpu.matmul %135, %136, %cst_54 {dimension_numbers = #tpu.dot_dimension_numbers<[1], [0], [0], [1], [0, 0, 1, 1], [], []>} : vector<128x128xbf16>, vector<128x32xbf16>, vector<128x32xf32> -> vector<128x32xf32>
    %c0_55 = arith.constant 0 : index
    %c0_56 = arith.constant 0 : index
    %138 = vector.load %arg6[%c0_55, %c0_56] : memref<1x32xf32, #tpu.memory_space<vmem>>, vector<1x32xf32>
    %139 = vector.broadcast %138 : vector<1x32xf32> to vector<128x32xf32>
    %140 = arith.addf %137, %139 : vector<128x32xf32>
    %141 = vector.shape_cast %140 : vector<128x32xf32> to vector<8x16x32xf32>
    %c0_57 = arith.constant 0 : index
    %c0_58 = arith.constant 0 : index
    %c0_59 = arith.constant 0 : index
    %142 = vector.load %arg7[%c0_57, %c0_58, %c0_59] : memref<8x16x32xf32, #tpu.memory_space<vmem>>, vector<8x16x32xf32>
    tpu.vector_store %arg7[%c0_57, %c0_58, %c0_59], %141 {strides = array<i32>} : memref<8x16x32xf32, #tpu.memory_space<vmem>>, vector<8x16x32xf32>,
    return
  }
  func.func @transform_0(%arg0: i32) -> (i32, i32) {
    %c0_i32 = arith.constant 0 : i32
    %c0_i32_0 = arith.constant 0 : i32
    return %arg0, %c0_i32 : i32, i32
  }
  func.func @transform_1(%arg0: i32) -> (i32, i32, i32) {
    %c0_i32 = arith.constant 0 : i32
    %c0_i32_0 = arith.constant 0 : i32
    %c0_i32_1 = arith.constant 0 : i32
    return %arg0, %c0_i32, %c0_i32_0 : i32, i32, i32
  }
  func.func @transform_2(%arg0: i32) -> (i32, i32, i32) {
    %c0_i32 = arith.constant 0 : i32
    %c0_i32_0 = arith.constant 0 : i32
    %c0_i32_1 = arith.constant 0 : i32
    %c0_i32_2 = arith.constant 0 : i32
    return %c0_i32, %c0_i32_0, %c0_i32_1 : i32, i32, i32
  }
  func.func @transform_3(%arg0: i32) -> (i32, i32, i32) {
    %c0_i32 = arith.constant 0 : i32
    %c0_i32_0 = arith.constant 0 : i32
    %c0_i32_1 = arith.constant 0 : i32
    %c0_i32_2 = arith.constant 0 : i32
    return %c0_i32, %c0_i32_0, %c0_i32_1 : i32, i32, i32
  }
  func.func @transform_4(%arg0: i32) -> (i32, i32) {
    %c0_i32 = arith.constant 0 : i32
    %c0_i32_0 = arith.constant 0 : i32
    %c0_i32_1 = arith.constant 0 : i32
    return %c0_i32, %c0_i32_0 : i32, i32
  }
  func.func @transform_5(%arg0: i32) -> (i32, i32) {
    %c0_i32 = arith.constant 0 : i32
    %c0_i32_0 = arith.constant 0 : i32
    %c0_i32_1 = arith.constant 0 : i32
    return %c0_i32, %c0_i32_0 : i32, i32
  }
  func.func @transform_6(%arg0: i32) -> (i32, i32, i32) {
    %c0_i32 = arith.constant 0 : i32
    %c0_i32_0 = arith.constant 0 : i32
    %c0_i32_1 = arith.constant 0 : i32
    return %arg0, %c0_i32, %c0_i32_0 : i32, i32, i32
  }
}

</mosaic_0001>

<llo_original>
// kernel: structure_extractor.1
$region0: #{structure_extractor.1}
  #allocation0 [shape = 'u32[]', space=smem, size = 0x4, offset = 0x4, fixed_abs, tag = 'smem constant byte address 0x4 - core index']
  #allocation1 [shape = 'u32[144,128]{1,0:T(1,128)}', space=vmem, size = 0x12000, scoped, tag = 'internal scratch']
  %s0 = inlined_call_operand.vmem [shape: bf16[256,128], index: 0, kind: input, shape index: {}]
  %s1 = inlined_call_operand.vmem [shape: f32[16,16,32], index: 1, kind: input, shape index: {}]
  %s2 = inlined_call_operand.vmem [shape: bf16[3,32,32], index: 2, kind: input, shape index: {}]
  %s3 = inlined_call_operand.vmem [shape: f32[3,1,32], index: 3, kind: input, shape index: {}]
  %s4 = inlined_call_operand.vmem [shape: bf16[128,32], index: 4, kind: input, shape index: {}]
  %s5 = inlined_call_operand.vmem [shape: f32[1,32], index: 5, kind: input, shape index: {}]
  %s6 = inlined_call_operand.hbm [shape: f32[16,16,32], index: 6, kind: output, shape index: {}]
  %s7 = sld [smem:[#allocation0]]
  $region57: #{structure_extractor.1} parent=0
    _
  %s9 = ssub.s32 1, %s7
  %s10 = scalar_select 0, %s9, %s7
  $region1: #{structure_extractor.1} parent=0
    #allocation2 [shape = 'u8[131072]{0}', space=vmem, size = 0x20000, scoped, tag = 'output window, operand 0']
    #allocation3 [shape = 's32[2]{0}', space=sflag, size = 0x8, scoped, tag = 'scoped memory for structure_extractor.1']
    %11 = vsyncpa [#allocation3], 0
    %s12 = scalar_lea.sflag [#allocation3], 1
    %13 = vsyncpa %s12, 0
    loop: start=0, step=1, limit=4
    $region2: #{structure_extractor.1} parent=1 // loop_pre_header
      _
    $region3: #{structure_extractor.1} parent=1 // loop_header
      %s15 = sphi 0, %s19
      %p16 = scmp.ge.s32.totalorder %s15, 4
      %s25 = sphi 0, %s27
      %s28 = sphi 0, %s25
      %s29 = sphi 0, %s28
      %s45 = sphi 0, %s29
      %s51 = sphi 0, %s53
      %s54 = sphi 0, %s51
      %s55 = sphi 0, %s54
      %s71 = sphi 0, %s55
      %s75 = sphi 0, %s75
      %s77 = sphi 0, %s75
      %s78 = sphi 0, %s77
      %s92 = sphi 0, %s78
      %s96 = sphi 0, %s96
      %s98 = sphi 0, %s96
      %s99 = sphi 0, %s98
      %s113 = sphi 0, %s99
      %s117 = sphi 0, %s117
      %s119 = sphi 0, %s117
      %s120 = sphi 0, %s119
      %s134 = sphi 0, %s120
      %s138 = sphi 0, %s138
      %s140 = sphi 0, %s138
      %s141 = sphi 0, %s140
      %s155 = sphi 0, %s141
      %s161 = sphi 0, %s163
      %s164 = sphi 0, %s161
      %s165 = sphi 0, %s164
      %s181 = sphi 0, %s165
    $region4: #{structure_extractor.1} parent=1 // loop_header_branch
      %18 = sbr.rel (%p16) target = $region8
    $region5: #{structure_extractor.1} parent=1 // loop_body
      %s20 = ssub.s32 %s15, 1
      %s21 = ssub.s32 %s15, 2
      %s22 = sadd.s32 %s15, 1
      %s23 = ssub.s32 %s15, %s22
      %p24 = scmp.eq.s32.totalorder %s23, 0
      %s26 = sadd.s32 %s25, 1
      %s27 = scalar_select %p24, %s25, %s26
      %p30 = pneg %p24
      %p31 = scmp.eq.s32.totalorder %s15, 1
      %p32 = por %p30, %p31
      %p33 = scmp.ne.s32.totalorder %s25, %s28
      %p34 = scmp.eq.s32.totalorder %s15, 0
      %p35 = por %p33, %p34
      %p36 = scmp.ne.s32.totalorder %s25, %s28
      %p37 = scmp.eq.s32.totalorder %s20, 1
      %p38 = por %p36, %p37
      %p39 = scmp.ne.s32.totalorder %s28, %s29
      %p40 = scmp.eq.s32.totalorder %s20, 0
      %p41 = por %p39, %p40
      %p42 = scmp.ne.s32.totalorder %s28, %s29
      %p43 = scmp.eq.s32.totalorder %s21, 1
      %p44 = por %p42, %p43
      %p46 = scmp.ne.s32.totalorder %s29, %s45
      %p47 = scmp.eq.s32.totalorder %s21, 0
      %p48 = por %p46, %p47
      %s49 = ssub.s32 %s15, %s22
      %p50 = scmp.eq.s32.totalorder %s49, 0
      %s52 = sadd.s32 %s51, 1
      %s53 = scalar_select %p50, %s51, %s52
      %p56 = pneg %p50
      %p57 = scmp.eq.s32.totalorder %s15, 1
      %p58 = por %p56, %p57
      %p59 = scmp.ne.s32.totalorder %s51, %s54
      %p60 = scmp.eq.s32.totalorder %s15, 0
      %p61 = por %p59, %p60
      %p62 = scmp.ne.s32.totalorder %s51, %s54
      %p63 = scmp.eq.s32.totalorder %s20, 1
      %p64 = por %p62, %p63
      %p65 = scmp.ne.s32.totalorder %s54, %s55
      %p66 = scmp.eq.s32.totalorder %s20, 0
      %p67 = por %p65, %p66
      %p68 = scmp.ne.s32.totalorder %s54, %s55
      %p69 = scmp.eq.s32.totalorder %s21, 1
      %p70 = por %p68, %p69
      %p72 = scmp.ne.s32.totalorder %s55, %s71
      %p73 = scmp.eq.s32.totalorder %s21, 0
      %p74 = por %p72, %p73
      %s76 = sadd.s32 %s75, 1
      %p79 = scmp.eq.s32.totalorder %s15, 1
      %p80 = scmp.ne.s32.totalorder %s75, %s77
      %p81 = scmp.eq.s32.totalorder %s15, 0
      %p82 = por %p80, %p81
      %p83 = scmp.ne.s32.totalorder %s75, %s77
      %p84 = scmp.eq.s32.totalorder %s20, 1
      %p85 = por %p83, %p84
      %p86 = scmp.ne.s32.totalorder %s77, %s78
      %p87 = scmp.eq.s32.totalorder %s20, 0
      %p88 = por %p86, %p87
      %p89 = scmp.ne.s32.totalorder %s77, %s78
      %p90 = scmp.eq.s32.totalorder %s21, 1
      %p91 = por %p89, %p90
      %p93 = scmp.ne.s32.totalorder %s78, %s92
      %p94 = scmp.eq.s32.totalorder %s21, 0
      %p95 = por %p93, %p94
      %s97 = sadd.s32 %s96, 1
      %p100 = scmp.eq.s32.totalorder %s15, 1
      %p101 = scmp.ne.s32.totalorder %s96, %s98
      %p102 = scmp.eq.s32.totalorder %s15, 0
      %p103 = por %p101, %p102
      %p104 = scmp.ne.s32.totalorder %s96, %s98
      %p105 = scmp.eq.s32.totalorder %s20, 1
      %p106 = por %p104, %p105
      %p107 = scmp.ne.s32.totalorder %s98, %s99
      %p108 = scmp.eq.s32.totalorder %s20, 0
      %p109 = por %p107, %p108
      %p110 = scmp.ne.s32.totalorder %s98, %s99
      %p111 = scmp.eq.s32.totalorder %s21, 1
      %p112 = por %p110, %p111
      %p114 = scmp.ne.s32.totalorder %s99, %s113
      %p115 = scmp.eq.s32.totalorder %s21, 0
      %p116 = por %p114, %p115
      %s118 = sadd.s32 %s117, 1
      %p121 = scmp.eq.s32.totalorder %s15, 1
      %p122 = scmp.ne.s32.totalorder %s117, %s119
      %p123 = scmp.eq.s32.totalorder %s15, 0
      %p124 = por %p122, %p123
      %p125 = scmp.ne.s32.totalorder %s117, %s119
      %p126 = scmp.eq.s32.totalorder %s20, 1
      %p127 = por %p125, %p126
      %p128 = scmp.ne.s32.totalorder %s119, %s120
      %p129 = scmp.eq.s32.totalorder %s20, 0
      %p130 = por %p128, %p129
      %p131 = scmp.ne.s32.totalorder %s119, %s120
      %p132 = scmp.eq.s32.totalorder %s21, 1
      %p133 = por %p131, %p132
      %p135 = scmp.ne.s32.totalorder %s120, %s134
      %p136 = scmp.eq.s32.totalorder %s21, 0
      %p137 = por %p135, %p136
      %s139 = sadd.s32 %s138, 1
      %p142 = scmp.eq.s32.totalorder %s15, 1
      %p143 = scmp.ne.s32.totalorder %s138, %s140
      %p144 = scmp.eq.s32.totalorder %s15, 0
      %p145 = por %p143, %p144
      %p146 = scmp.ne.s32.totalorder %s138, %s140
      %p147 = scmp.eq.s32.totalorder %s20, 1
      %p148 = por %p146, %p147
      %p149 = scmp.ne.s32.totalorder %s140, %s141
      %p150 = scmp.eq.s32.totalorder %s20, 0
      %p151 = por %p149, %p150
      %p152 = scmp.ne.s32.totalorder %s140, %s141
      %p153 = scmp.eq.s32.totalorder %s21, 1
      %p154 = por %p152, %p153
      %p156 = scmp.ne.s32.totalorder %s141, %s155
      %p157 = scmp.eq.s32.totalorder %s21, 0
      %p158 = por %p156, %p157
      %s159 = ssub.s32 %s15, %s22
      %p160 = scmp.eq.s32.totalorder %s159, 0
      %s162 = sadd.s32 %s161, 1
      %s163 = scalar_select %p160, %s161, %s162
      %p166 = pneg %p160
      %p167 = scmp.eq.s32.totalorder %s15, 1
      %p168 = por %p166, %p167
      %p169 = scmp.ne.s32.totalorder %s161, %s164
      %p170 = scmp.eq.s32.totalorder %s15, 0
      %p171 = por %p169, %p170
      %p172 = scmp.ne.s32.totalorder %s161, %s164
      %p173 = scmp.eq.s32.totalorder %s20, 1
      %p174 = por %p172, %p173
      %p175 = scmp.ne.s32.totalorder %s164, %s165
      %p176 = scmp.eq.s32.totalorder %s20, 0
      %p177 = por %p175, %p176
      %p178 = scmp.ne.s32.totalorder %s164, %s165
      %p179 = scmp.eq.s32.totalorder %s21, 1
      %p180 = por %p178, %p179
      %p182 = scmp.ne.s32.totalorder %s165, %s181
      %p183 = scmp.eq.s32.totalorder %s21, 0
      %p184 = por %p182, %p183
      %p185 = scmp.le.s32.totalorder 1, %s15
      %p186 = scmp.lt.s32.totalorder %s15, 3
      %p187 = pnand %p185, %p186
      %p188 = pneg %p187
      // Predicated region
      $region9: #{structure_extractor.1} parent=5 // pred_check
        _
      $region10: #{structure_extractor.1} parent=5 // pred_check_branch
        %190 = sbr.rel (%p187) target = $region12
      $region11: #{structure_extractor.1} parent=5 // pred_region
        %s191 = ssub.s32 %s15, 1
        // Predicated region
        $region13: #{structure_extractor.1} parent=11 // pred_check
          %p192 = pneg %p88
        $region14: #{structure_extractor.1} parent=11 // pred_check_branch
          %194 = sbr.rel (%p192) target = $region16
        $region15: #{structure_extractor.1} parent=11 // pred_region
          _
        $region16: #{structure_extractor.1} parent=11 // pred_fallthru
          _
        // Predicated region
        $region17: #{structure_extractor.1} parent=11 // pred_check
          %p195 = pneg %p109
        $region18: #{structure_extractor.1} parent=11 // pred_check_branch
          %197 = sbr.rel (%p195) target = $region20
        $region19: #{structure_extractor.1} parent=11 // pred_region
          _
        $region20: #{structure_extractor.1} parent=11 // pred_fallthru
          _
        // Predicated region
        $region21: #{structure_extractor.1} parent=11 // pred_check
          %p198 = pneg %p130
        $region22: #{structure_extractor.1} parent=11 // pred_check_branch
          %200 = sbr.rel (%p198) target = $region24
        $region23: #{structure_extractor.1} parent=11 // pred_region
          _
        $region24: #{structure_extractor.1} parent=11 // pred_fallthru
          _
        // Predicated region
        $region25: #{structure_extractor.1} parent=11 // pred_check
          %p201 = pneg %p151
        $region26: #{structure_extractor.1} parent=11 // pred_check_branch
          %203 = sbr.rel (%p201) target = $region28
        $region27: #{structure_extractor.1} parent=11 // pred_region
          _
        $region28: #{structure_extractor.1} parent=11 // pred_fallthru
          _
      $region12: #{structure_extractor.1} parent=5 // pred_fallthru
        _
      %p204 = scmp.lt.s32.totalorder %s15, 2
      // Predicated region
      $region29: #{structure_extractor.1} parent=5 // pred_check
        %p205 = pneg %p204
      $region30: #{structure_extractor.1} parent=5 // pred_check_branch
        %207 = sbr.rel (%p205) target = $region32
      $region31: #{structure_extractor.1} parent=5 // pred_region
        // Predicated region
        $region33: #{structure_extractor.1} parent=31 // pred_check
          %p208 = pneg %p35
        $region34: #{structure_extractor.1} parent=31 // pred_check_branch
          %210 = sbr.rel (%p208) target = $region36
        $region35: #{structure_extractor.1} parent=31 // pred_region
          %s211 = smul.u32 16, %s15
          %p212 = scmp.lt.s32.totalorder %s211, 31
          %s213 = scalar_select %p212, %s211, 31
          %s214 = smul.addr %s213, 4
          %s215 = scalar_lea.vmem %s0, %s214
          %s216 = smul.u32 16, %s15
        $region36: #{structure_extractor.1} parent=31 // pred_fallthru
          _
        // Predicated region
        $region37: #{structure_extractor.1} parent=31 // pred_check
          %p217 = pneg %p61
        $region38: #{structure_extractor.1} parent=31 // pred_check_branch
          %219 = sbr.rel (%p217) target = $region40
        $region39: #{structure_extractor.1} parent=31 // pred_region
          %s220 = smul.u32 8, %s15
          %p221 = scmp.lt.s32.totalorder %s220, 15
          %s222 = scalar_select %p221, %s220, 15
          %s223 = smul.addr %s222, 2
          %s224 = smul.addr %s223, 8
          %s225 = scalar_lea.vmem %s1, %s224
          %s226 = smul.u32 8, %s15
        $region40: #{structure_extractor.1} parent=31 // pred_fallthru
          _
      $region32: #{structure_extractor.1} parent=5 // pred_fallthru
        _
      %p227 = scmp.le.s32.totalorder 1, %s15
      %p228 = scmp.lt.s32.totalorder %s15, 3
      %p229 = pnand %p227, %p228
      %p230 = pneg %p229
      // Predicated region
      $region41: #{structure_extractor.1} parent=5 // pred_check
        _
      $region42: #{structure_extractor.1} parent=5 // pred_check_branch
        %232 = sbr.rel (%p229) target = $region44
      $region43: #{structure_extractor.1} parent=5 // pred_region
        %s233 = ssub.s32 %s15, 1
        %s234 = smul.u32 16, %s20
        %p235 = scmp.lt.s32.totalorder %s234, 31
        %s236 = scalar_select %p235, %s234, 31
        %s237 = smul.addr %s236, 4
        %s238 = scalar_lea.vmem %s0, %s237
        %p239 = pneg %p41
        %p240 = pneg %p38
        %s241 = smul.u32 8, %s20
        %p242 = scmp.lt.s32.totalorder %s241, 15
        %s243 = scalar_select %p242, %s241, 15
        %s244 = smul.addr %s243, 2
        %s245 = smul.addr %s244, 8
        %s246 = scalar_lea.vmem %s1, %s245
        %p247 = pneg %p67
        %p248 = pneg %p64
        %p249 = pneg %p88
        %p250 = pneg %p85
        %p251 = pneg %p109
        %p252 = pneg %p106
        %p253 = pneg %p130
        %p254 = pneg %p127
        %p255 = pneg %p151
        %p256 = pneg %p148
        %p257 = pneg %p177
        %p258 = pneg %p174
        %s259 = sand.u32 %s164, 1
        %s260 = scalar_lea.sflag [#allocation3], %s259
        %s261 = sand.u32 %s164, 1
        %s262 = smul.addr %s261, 128
        %s263 = scalar_lea.vmem [#allocation2], %s262
        %s264 = smul.u32 16, %s20
        %p265 = scmp.lt.s32.totalorder %s264, 31
        %s266 = scalar_select %p265, %s264, 31
        %s267 = smul.addr %s266, 4
        %s268 = scalar_lea.vmem %s0, %s267
        %s269 = smul.u32 16, %s20
        %s270 = smul.u32 8, %s20
        %p271 = scmp.lt.s32.totalorder %s270, 15
        %s272 = scalar_select %p271, %s270, 15
        %s273 = smul.addr %s272, 2
        %s274 = smul.addr %s273, 8
        %s275 = scalar_lea.vmem %s1, %s274
        %s276 = smul.u32 8, %s20
        %s277 = smul.u32 8, %s20
        %v279 = vld [vmem:[%s268] sm:$0xf]
        %v280 = vld [vmem:[%s268 + $0x4] sm:$0xf]
        %v281 = vld [vmem:[%s268 + $0x8] sm:$0xf]
        %v282 = vld [vmem:[%s268 + $0xc] sm:$0xf]
        %v283 = vld [vmem:[%s268 + $0x10] sm:$0xf]
        %v284 = vld [vmem:[%s268 + $0x14] sm:$0xf]
        %v285 = vld [vmem:[%s268 + $0x18] sm:$0xf]
        %v286 = vld [vmem:[%s268 + $0x1c] sm:$0xf]
        %v287 = vld [vmem:[%s268 + $0x20] sm:$0xf]
        %v288 = vld [vmem:[%s268 + $0x24] sm:$0xf]
        %v289 = vld [vmem:[%s268 + $0x28] sm:$0xf]
        %v290 = vld [vmem:[%s268 + $0x2c] sm:$0xf]
        %v291 = vld [vmem:[%s268 + $0x30] sm:$0xf]
        %v292 = vld [vmem:[%s268 + $0x34] sm:$0xf]
        %v293 = vld [vmem:[%s268 + $0x38] sm:$0xf]
        %v294 = vld [vmem:[%s268 + $0x3c] sm:$0xf]
        %v295 = vld [vmem:[%s275] sm:$0xff]
        %v296 = vld [vmem:[%s275 + $0x8] sm:$0xff]
        %v297 = vld [vmem:[%s275 + $0x10] sm:$0xff]
        %v298 = vld [vmem:[%s275 + $0x18] sm:$0xff]
        %v299 = vld [vmem:[%s275 + $0x20] sm:$0xff]
        %v300 = vld [vmem:[%s275 + $0x28] sm:$0xff]
        %v301 = vld [vmem:[%s275 + $0x30] sm:$0xff]
        %v302 = vld [vmem:[%s275 + $0x38] sm:$0xff]
        %v303 = vld [vmem:[%s275 + $0x40] sm:$0xff]
        %v304 = vld [vmem:[%s275 + $0x48] sm:$0xff]
        %v305 = vld [vmem:[%s275 + $0x50] sm:$0xff]
        %v306 = vld [vmem:[%s275 + $0x58] sm:$0xff]
        %v307 = vld [vmem:[%s275 + $0x60] sm:$0xff]
        %v308 = vld [vmem:[%s275 + $0x68] sm:$0xff]
        %v309 = vld [vmem:[%s275 + $0x70] sm:$0xff]
        %v310 = vld [vmem:[%s275 + $0x78] sm:$0xff]
        %v311 = vpack.c.bf16 %v296, %v295
        %v312 = vpack.c.bf16 %v298, %v297
        %v313 = vpack.c.bf16 %v300, %v299
        %v314 = vpack.c.bf16 %v302, %v301
        %v315 = vpack.c.bf16 %v304, %v303
        %v316 = vpack.c.bf16 %v306, %v305
        %v317 = vpack.c.bf16 %v308, %v307
        %v318 = vpack.c.bf16 %v310, %v309
        %v319 = vld [vmem:[%s2] sm:$0xf]
        %v320 = vld [vmem:[%s2 + $0x4] sm:$0xf]
        %v321 = vld [vmem:[%s2 + $0x8] sm:$0xf]
        %v322 = vld [vmem:[%s2 + $0xc] sm:$0xf]
        %v327 = vunpack.c.l.b16 %v319
        %v328 = vunpack.c.l.b16 %v320
        %v329 = vunpack.c.l.b16 %v321
        %v330 = vunpack.c.l.b16 %v322
        %v331 = vpack.c.b16 %v328, %v327
        %v332 = vpack.c.b16 %v330, %v329
        %vm335 = vcmask 261120
        %v337 = vsel %vm335, %v311, 0
        %v340 = vsel %vm335, %v312, 0
        %v343 = vsel %vm335, %v313, 0
        %v346 = vsel %vm335, %v314, 0
        %v349 = vsel %vm335, %v315, 0
        %v352 = vsel %vm335, %v316, 0
        %v355 = vsel %vm335, %v317, 0
        %v358 = vsel %vm335, %v318, 0
        %360 = vmatprep.subr.bf16.mxu0 0
        %361 = vmatpush1.bf16.msra.mxu0 %v331
        %362 = vmatprep.subr.bf16.mxu0 0
        %363 = vmatpush1.bf16.msra.mxu0 %v332
        %364 = vmatprep.subr.bf16.mxu0 0
        %365 = vmatpush1.bf16.msra.mxu0 0
        %366 = vmatprep.subr.bf16.mxu0 0
        %367 = vmatpush1.bf16.msra.mxu0 0
        %368 = vmatprep.subr.bf16.mxu0 0
        %369 = vmatpush1.bf16.msra.mxu0 0
        %370 = vmatprep.subr.bf16.mxu0 0
        %371 = vmatpush1.bf16.msra.mxu0 0
        %372 = vmatprep.subr.bf16.mxu0 0
        %373 = vmatpush1.bf16.msra.mxu0 0
        %374 = vmatprep.subr.bf16.mxu0 0
        %375 = vmatpush1.bf16.msra.mxu0 0
        %376 = vmatprep.subr.bf16.mxu0 0
        %377 = vmatpush1.bf16.msra.mxu0 0
        %378 = vmatprep.subr.bf16.mxu0 0
        %379 = vmatpush1.bf16.msra.mxu0 0
        %380 = vmatprep.subr.bf16.mxu0 0
        %381 = vmatpush1.bf16.msra.mxu0 0
        %382 = vmatprep.subr.bf16.mxu0 0
        %383 = vmatpush1.bf16.msra.mxu0 0
        %384 = vmatprep.subr.bf16.mxu0 0
        %385 = vmatpush1.bf16.msra.mxu0 0
        %386 = vmatprep.subr.bf16.mxu0 0
        %387 = vmatpush1.bf16.msra.mxu0 0
        %388 = vmatprep.subr.bf16.mxu0 0
        %389 = vmatpush1.bf16.msra.mxu0 0
        %390 = vmatprep.subr.bf16.mxu0 0
        %391 = vmatpush1.bf16.msra.mxu0 0
        %392 = vmatprep.mubr.bf16.mxu0 0
        %393 = vmatmul.mubr.bf16.gmra.mrb[0].mxu0 %v337
        %v394 = vpop.f32.mrb[0].mxu0
        %v395 = vadd.f32 0.0, %v394
        %v396 = vpop.f32.mrb[0].mxu0
        %v397 = vpop.f32.mrb[0].mxu0
        %v398 = vadd.f32 0.0, %v397
        %v399 = vpop.f32.mrb[0].mxu0
        %400 = vmatprep.mubr.bf16.mxu0 0
        %401 = vmatmul.mubr.bf16.gmra.mrb[0].mxu0 %v340
        %v402 = vpop.f32.mrb[0].mxu0
        %v403 = vadd.f32 0.0, %v402
        %v404 = vpop.f32.mrb[0].mxu0
        %v405 = vpop.f32.mrb[0].mxu0
        %v406 = vadd.f32 0.0, %v405
        %v407 = vpop.f32.mrb[0].mxu0
        %408 = vmatprep.mubr.bf16.mxu0 0
        %409 = vmatmul.mubr.bf16.gmra.mrb[0].mxu0 %v343
        %v410 = vpop.f32.mrb[0].mxu0
        %v411 = vadd.f32 0.0, %v410
        %v412 = vpop.f32.mrb[0].mxu0
        %v413 = vpop.f32.mrb[0].mxu0
        %v414 = vadd.f32 0.0, %v413
        %v415 = vpop.f32.mrb[0].mxu0
        %416 = vmatprep.mubr.bf16.mxu0 0
        %417 = vmatmul.mubr.bf16.gmra.mrb[0].mxu0 %v346
        %v418 = vpop.f32.mrb[0].mxu0
        %v419 = vadd.f32 0.0, %v418
        %v420 = vpop.f32.mrb[0].mxu0
        %v421 = vpop.f32.mrb[0].mxu0
        %v422 = vadd.f32 0.0, %v421
        %v423 = vpop.f32.mrb[0].mxu0
        %424 = vmatprep.mubr.bf16.mxu0 0
        %425 = vmatmul.mubr.bf16.gmra.mrb[0].mxu0 %v349
        %v426 = vpop.f32.mrb[0].mxu0
        %v427 = vadd.f32 0.0, %v426
        %v428 = vpop.f32.mrb[0].mxu0
        %v429 = vpop.f32.mrb[0].mxu0
        %v430 = vadd.f32 0.0, %v429
        %v431 = vpop.f32.mrb[0].mxu0
        %432 = vmatprep.mubr.bf16.mxu0 0
        %433 = vmatmul.mubr.bf16.gmra.mrb[0].mxu0 %v352
        %v434 = vpop.f32.mrb[0].mxu0
        %v435 = vadd.f32 0.0, %v434
        %v436 = vpop.f32.mrb[0].mxu0
        %v437 = vpop.f32.mrb[0].mxu0
        %v438 = vadd.f32 0.0, %v437
        %v439 = vpop.f32.mrb[0].mxu0
        %440 = vmatprep.mubr.bf16.mxu0 0
        %441 = vmatmul.mubr.bf16.gmra.mrb[0].mxu0 %v355
        %v442 = vpop.f32.mrb[0].mxu0
        %v443 = vadd.f32 0.0, %v442
        %v444 = vpop.f32.mrb[0].mxu0
        %v445 = vpop.f32.mrb[0].mxu0
        %v446 = vadd.f32 0.0, %v445
        %v447 = vpop.f32.mrb[0].mxu0
        %448 = vmatprep.mubr.bf16.mxu0 0
        %449 = vmatmul.mubr.bf16.gmra.mrb[0].mxu0 %v358
        %v450 = vpop.f32.mrb[0].mxu0
        %v451 = vadd.f32 0.0, %v450
        %v452 = vpop.f32.mrb[0].mxu0
        %v453 = vpop.f32.mrb[0].mxu0
        %v454 = vadd.f32 0.0, %v453
        %v455 = vpop.f32.mrb[0].mxu0
        %456 = vdwg.mxu0
        %v457 = vpack.c.bf16 %v398, %v395
        %v458 = vpack.c.bf16 %v406, %v403
        %v459 = vpack.c.bf16 %v414, %v411
        %v460 = vpack.c.bf16 %v422, %v419
        %v461 = vpack.c.bf16 %v430, %v427
        %v462 = vpack.c.bf16 %v438, %v435
        %v463 = vpack.c.bf16 %v446, %v443
        %v464 = vpack.c.bf16 %v454, %v451
        %v481 = vunpack.c.l.b16 %v279
        %v482 = vunpack.c.l.b16 %v280
        %v483 = vunpack.c.l.b16 %v281
        %v484 = vunpack.c.l.b16 %v282
        %v485 = vunpack.c.l.b16 %v283
        %v486 = vunpack.c.l.b16 %v284
        %v487 = vunpack.c.l.b16 %v285
        %v488 = vunpack.c.l.b16 %v286
        %v489 = vunpack.c.l.b16 %v287
        %v490 = vunpack.c.l.b16 %v288
        %v491 = vunpack.c.l.b16 %v289
        %v492 = vunpack.c.l.b16 %v290
        %v493 = vunpack.c.l.b16 %v291
        %v494 = vunpack.c.l.b16 %v292
        %v495 = vunpack.c.l.b16 %v293
        %v496 = vunpack.c.l.b16 %v294
        %v497 = vpack.c.b16 %v482, %v481
        %v498 = vpack.c.b16 %v484, %v483
        %v499 = vpack.c.b16 %v486, %v485
        %v500 = vpack.c.b16 %v488, %v487
        %v501 = vpack.c.b16 %v490, %v489
        %v502 = vpack.c.b16 %v492, %v491
        %v503 = vpack.c.b16 %v494, %v493
        %v504 = vpack.c.b16 %v496, %v495
        %513 = vmatprep.subr.bf16.mxu0 0
        %514 = vmatpush1.bf16.msra.mxu0 %v457
        %515 = vmatprep.subr.bf16.mxu0 0
        %516 = vmatpush1.bf16.msra.mxu0 %v458
        %517 = vmatprep.subr.bf16.mxu0 0
        %518 = vmatpush1.bf16.msra.mxu0 %v459
        %519 = vmatprep.subr.bf16.mxu0 0
        %520 = vmatpush1.bf16.msra.mxu0 %v460
        %521 = vmatprep.subr.bf16.mxu0 0
        %522 = vmatpush1.bf16.msra.mxu0 %v461
        %523 = vmatprep.subr.bf16.mxu0 0
        %524 = vmatpush1.bf16.msra.mxu0 %v462
        %525 = vmatprep.subr.bf16.mxu0 0
        %526 = vmatpush1.bf16.msra.mxu0 %v463
        %527 = vmatprep.subr.bf16.mxu0 0
        %528 = vmatpush1.bf16.msra.mxu0 %v464
        %529 = vmatprep.subr.bf16.mxu0 0
        %530 = vmatpush1.bf16.msra.mxu0 0
        %531 = vmatprep.subr.bf16.mxu0 0
        %532 = vmatpush1.bf16.msra.mxu0 0
        %533 = vmatprep.subr.bf16.mxu0 0
        %534 = vmatpush1.bf16.msra.mxu0 0
        %535 = vmatprep.subr.bf16.mxu0 0
        %536 = vmatpush1.bf16.msra.mxu0 0
        %537 = vmatprep.subr.bf16.mxu0 0
        %538 = vmatpush1.bf16.msra.mxu0 0
        %539 = vmatprep.subr.bf16.mxu0 0
        %540 = vmatpush1.bf16.msra.mxu0 0
        %541 = vmatprep.subr.bf16.mxu0 0
        %542 = vmatpush1.bf16.msra.mxu0 0
        %543 = vmatprep.subr.bf16.mxu0 0
        %544 = vmatpush1.bf16.msra.mxu0 0
        %545 = vmatprep.mubr.bf16.mxu0 0
        %546 = vmatmul.mubr.bf16.gmra.mrb[0].mxu0 %v497
        %v547 = vpop.f32.mrb[0].mxu0
        %v548 = vadd.f32 0.0, %v547
        %v549 = vpop.f32.mrb[0].mxu0
        %v550 = vpop.f32.mrb[0].mxu0
        %v551 = vadd.f32 0.0, %v550
        %v552 = vpop.f32.mrb[0].mxu0
        %553 = vmatprep.mubr.bf16.mxu0 0
        %554 = vmatmul.mubr.bf16.gmra.mrb[0].mxu0 %v498
        %v555 = vpop.f32.mrb[0].mxu0
        %v556 = vadd.f32 0.0, %v555
        %v557 = vpop.f32.mrb[0].mxu0
        %v558 = vpop.f32.mrb[0].mxu0
        %v559 = vadd.f32 0.0, %v558
        %v560 = vpop.f32.mrb[0].mxu0
        %561 = vmatprep.mubr.bf16.mxu0 0
        %562 = vmatmul.mubr.bf16.gmra.mrb[0].mxu0 %v499
        %v563 = vpop.f32.mrb[0].mxu0
        %v564 = vadd.f32 0.0, %v563
        %v565 = vpop.f32.mrb[0].mxu0
        %v566 = vpop.f32.mrb[0].mxu0
        %v567 = vadd.f32 0.0, %v566
        %v568 = vpop.f32.mrb[0].mxu0
        %569 = vmatprep.mubr.bf16.mxu0 0
        %570 = vmatmul.mubr.bf16.gmra.mrb[0].mxu0 %v500
        %v571 = vpop.f32.mrb[0].mxu0
        %v572 = vadd.f32 0.0, %v571
        %v573 = vpop.f32.mrb[0].mxu0
        %v574 = vpop.f32.mrb[0].mxu0
        %v575 = vadd.f32 0.0, %v574
        %v576 = vpop.f32.mrb[0].mxu0
        %577 = vmatprep.mubr.bf16.mxu0 0
        %578 = vmatmul.mubr.bf16.gmra.mrb[0].mxu0 %v501
        %v579 = vpop.f32.mrb[0].mxu0
        %v580 = vadd.f32 0.0, %v579
        %v581 = vpop.f32.mrb[0].mxu0
        %v582 = vpop.f32.mrb[0].mxu0
        %v583 = vadd.f32 0.0, %v582
        %v584 = vpop.f32.mrb[0].mxu0
        %585 = vmatprep.mubr.bf16.mxu0 0
        %586 = vmatmul.mubr.bf16.gmra.mrb[0].mxu0 %v502
        %v587 = vpop.f32.mrb[0].mxu0
        %v588 = vadd.f32 0.0, %v587
        %v589 = vpop.f32.mrb[0].mxu0
        %v590 = vpop.f32.mrb[0].mxu0
        %v591 = vadd.f32 0.0, %v590
        %v592 = vpop.f32.mrb[0].mxu0
        %593 = vmatprep.mubr.bf16.mxu0 0
        %594 = vmatmul.mubr.bf16.gmra.mrb[0].mxu0 %v503
        %v595 = vpop.f32.mrb[0].mxu0
        %v596 = vadd.f32 0.0, %v595
        %v597 = vpop.f32.mrb[0].mxu0
        %v598 = vpop.f32.mrb[0].mxu0
        %v599 = vadd.f32 0.0, %v598
        %v600 = vpop.f32.mrb[0].mxu0
        %601 = vmatprep.mubr.bf16.mxu0 0
        %602 = vmatmul.mubr.bf16.gmra.mrb[0].mxu0 %v504
        %v603 = vpop.f32.mrb[0].mxu0
        %v604 = vadd.f32 0.0, %v603
        %v605 = vpop.f32.mrb[0].mxu0
        %v606 = vpop.f32.mrb[0].mxu0
        %v607 = vadd.f32 0.0, %v606
        %v608 = vpop.f32.mrb[0].mxu0
        %609 = vdwg.mxu0
        %v610 = vld [vmem:[%s3] sm:$0x1]
        %v612 = vlaneseq
        %v613 = vshrl.u32 %v612, 7
        %v614 = vsub.s32 0, %v613
        %v615 = vrot.slane %v610, %v614
        %v617 = vadd.f32 %v548, %v615
        %v618 = vadd.f32 %v551, %v615
        %v619 = vadd.f32 %v556, %v615
        %v620 = vadd.f32 %v559, %v615
        %v621 = vadd.f32 %v564, %v615
        %v622 = vadd.f32 %v567, %v615
        %v623 = vadd.f32 %v572, %v615
        %v624 = vadd.f32 %v575, %v615
        %v625 = vadd.f32 %v580, %v615
        %v626 = vadd.f32 %v583, %v615
        %v627 = vadd.f32 %v588, %v615
        %v628 = vadd.f32 %v591, %v615
        %v629 = vadd.f32 %v596, %v615
        %v630 = vadd.f32 %v599, %v615
        %v631 = vadd.f32 %v604, %v615
        %v632 = vadd.f32 %v607, %v615
        %v633 = vmax.f32 %v617, 0.0
        %v634 = vmax.f32 %v618, 0.0
        %v635 = vmax.f32 %v619, 0.0
        %v636 = vmax.f32 %v620, 0.0
        %v637 = vmax.f32 %v621, 0.0
        %v638 = vmax.f32 %v622, 0.0
        %v639 = vmax.f32 %v623, 0.0
        %v640 = vmax.f32 %v624, 0.0
        %v641 = vmax.f32 %v625, 0.0
        %v642 = vmax.f32 %v626, 0.0
        %v643 = vmax.f32 %v627, 0.0
        %v644 = vmax.f32 %v628, 0.0
        %v645 = vmax.f32 %v629, 0.0
        %v646 = vmax.f32 %v630, 0.0
        %v647 = vmax.f32 %v631, 0.0
        %v648 = vmax.f32 %v632, 0.0
        %v649 = vpack.c.bf16 %v634, %v633
        %v650 = vpack.c.bf16 %v636, %v635
        %v651 = vpack.c.bf16 %v638, %v637
        %v652 = vpack.c.bf16 %v640, %v639
        %v653 = vpack.c.bf16 %v642, %v641
        %v654 = vpack.c.bf16 %v644, %v643
        %v655 = vpack.c.bf16 %v646, %v645
        %v656 = vpack.c.bf16 %v648, %v647
        %s657 = scalar_lea.vmem %s2, 16
        %v658 = vld [vmem:[%s657] sm:$0xf]
        %v659 = vld [vmem:[%s657 + $0x4] sm:$0xf]
        %v660 = vld [vmem:[%s657 + $0x8] sm:$0xf]
        %v661 = vld [vmem:[%s657 + $0xc] sm:$0xf]
        %v666 = vunpack.c.l.b16 %v658
        %v667 = vunpack.c.l.b16 %v659
        %v668 = vunpack.c.l.b16 %v660
        %v669 = vunpack.c.l.b16 %v661
        %v670 = vpack.c.b16 %v667, %v666
        %v671 = vpack.c.b16 %v669, %v668
        %v675 = vsel %vm335, %v649, 0
        %v678 = vsel %vm335, %v650, 0
        %v681 = vsel %vm335, %v651, 0
        %v684 = vsel %vm335, %v652, 0
        %v687 = vsel %vm335, %v653, 0
        %v690 = vsel %vm335, %v654, 0
        %v693 = vsel %vm335, %v655, 0
        %v696 = vsel %vm335, %v656, 0
        %698 = vmatprep.subr.bf16.mxu0 0
        %699 = vmatpush1.bf16.msra.mxu0 %v670
        %700 = vmatprep.subr.bf16.mxu0 0
        %701 = vmatpush1.bf16.msra.mxu0 %v671
        %702 = vmatprep.subr.bf16.mxu0 0
        %703 = vmatpush1.bf16.msra.mxu0 0
        %704 = vmatprep.subr.bf16.mxu0 0
        %705 = vmatpush1.bf16.msra.mxu0 0
        %706 = vmatprep.subr.bf16.mxu0 0
        %707 = vmatpush1.bf16.msra.mxu0 0
        %708 = vmatprep.subr.bf16.mxu0 0
        %709 = vmatpush1.bf16.msra.mxu0 0
        %710 = vmatprep.subr.bf16.mxu0 0
        %711 = vmatpush1.bf16.msra.mxu0 0
        %712 = vmatprep.subr.bf16.mxu0 0
        %713 = vmatpush1.bf16.msra.mxu0 0
        %714 = vmatprep.subr.bf16.mxu0 0
        %715 = vmatpush1.bf16.msra.mxu0 0
        %716 = vmatprep.subr.bf16.mxu0 0
        %717 = vmatpush1.bf16.msra.mxu0 0
        %718 = vmatprep.subr.bf16.mxu0 0
        %719 = vmatpush1.bf16.msra.mxu0 0
        %720 = vmatprep.subr.bf16.mxu0 0
        %721 = vmatpush1.bf16.msra.mxu0 0
        %722 = vmatprep.subr.bf16.mxu0 0
        %723 = vmatpush1.bf16.msra.mxu0 0
        %724 = vmatprep.subr.bf16.mxu0 0
        %725 = vmatpush1.bf16.msra.mxu0 0
        %726 = vmatprep.subr.bf16.mxu0 0
        %727 = vmatpush1.bf16.msra.mxu0 0
        %728 = vmatprep.subr.bf16.mxu0 0
        %729 = vmatpush1.bf16.msra.mxu0 0
        %730 = vmatprep.mubr.bf16.mxu0 0
        %731 = vmatmul.mubr.bf16.gmra.mrb[0].mxu0 %v675
        %v732 = vpop.f32.mrb[0].mxu0
        %v733 = vadd.f32 0.0, %v732
        %v734 = vpop.f32.mrb[0].mxu0
        %v735 = vpop.f32.mrb[0].mxu0
        %v736 = vadd.f32 0.0, %v735
        %v737 = vpop.f32.mrb[0].mxu0
        %738 = vmatprep.mubr.bf16.mxu0 0
        %739 = vmatmul.mubr.bf16.gmra.mrb[0].mxu0 %v678
        %v740 = vpop.f32.mrb[0].mxu0
        %v741 = vadd.f32 0.0, %v740
        %v742 = vpop.f32.mrb[0].mxu0
        %v743 = vpop.f32.mrb[0].mxu0
        %v744 = vadd.f32 0.0, %v743
        %v745 = vpop.f32.mrb[0].mxu0
        %746 = vmatprep.mubr.bf16.mxu0 0
        %747 = vmatmul.mubr.bf16.gmra.mrb[0].mxu0 %v681
        %v748 = vpop.f32.mrb[0].mxu0
        %v749 = vadd.f32 0.0, %v748
        %v750 = vpop.f32.mrb[0].mxu0
        %v751 = vpop.f32.mrb[0].mxu0
        %v752 = vadd.f32 0.0, %v751
        %v753 = vpop.f32.mrb[0].mxu0
        %754 = vmatprep.mubr.bf16.mxu0 0
        %755 = vmatmul.mubr.bf16.gmra.mrb[0].mxu0 %v684
        %v756 = vpop.f32.mrb[0].mxu0
        %v757 = vadd.f32 0.0, %v756
        %v758 = vpop.f32.mrb[0].mxu0
        %v759 = vpop.f32.mrb[0].mxu0
        %v760 = vadd.f32 0.0, %v759
        %v761 = vpop.f32.mrb[0].mxu0
        %762 = vmatprep.mubr.bf16.mxu0 0
        %763 = vmatmul.mubr.bf16.gmra.mrb[0].mxu0 %v687
        %v764 = vpop.f32.mrb[0].mxu0
        %v765 = vadd.f32 0.0, %v764
        %v766 = vpop.f32.mrb[0].mxu0
        %v767 = vpop.f32.mrb[0].mxu0
        %v768 = vadd.f32 0.0, %v767
        %v769 = vpop.f32.mrb[0].mxu0
        %770 = vmatprep.mubr.bf16.mxu0 0
        %771 = vmatmul.mubr.bf16.gmra.mrb[0].mxu0 %v690
        %v772 = vpop.f32.mrb[0].mxu0
        %v773 = vadd.f32 0.0, %v772
        %v774 = vpop.f32.mrb[0].mxu0
        %v775 = vpop.f32.mrb[0].mxu0
        %v776 = vadd.f32 0.0, %v775
        %v777 = vpop.f32.mrb[0].mxu0
        %778 = vmatprep.mubr.bf16.mxu0 0
        %779 = vmatmul.mubr.bf16.gmra.mrb[0].mxu0 %v693
        %v780 = vpop.f32.mrb[0].mxu0
        %v781 = vadd.f32 0.0, %v780
        %v782 = vpop.f32.mrb[0].mxu0
        %v783 = vpop.f32.mrb[0].mxu0
        %v784 = vadd.f32 0.0, %v783
        %v785 = vpop.f32.mrb[0].mxu0
        %786 = vmatprep.mubr.bf16.mxu0 0
        %787 = vmatmul.mubr.bf16.gmra.mrb[0].mxu0 %v696
        %v788 = vpop.f32.mrb[0].mxu0
        %v789 = vadd.f32 0.0, %v788
        %v790 = vpop.f32.mrb[0].mxu0
        %v791 = vpop.f32.mrb[0].mxu0
        %v792 = vadd.f32 0.0, %v791
        %v793 = vpop.f32.mrb[0].mxu0
        %794 = vdwg.mxu0
        %v795 = vpack.c.bf16 %v736, %v733
        %v796 = vpack.c.bf16 %v744, %v741
        %v797 = vpack.c.bf16 %v752, %v749
        %v798 = vpack.c.bf16 %v760, %v757
        %v799 = vpack.c.bf16 %v768, %v765
        %v800 = vpack.c.bf16 %v776, %v773
        %v801 = vpack.c.bf16 %v784, %v781
        %v802 = vpack.c.bf16 %v792, %v789
        %803 = vmatprep.subr.bf16.mxu0 0
        %804 = vmatpush1.bf16.msra.mxu0 %v795
        %805 = vmatprep.subr.bf16.mxu0 0
        %806 = vmatpush1.bf16.msra.mxu0 %v796
        %807 = vmatprep.subr.bf16.mxu0 0
        %808 = vmatpush1.bf16.msra.mxu0 %v797
        %809 = vmatprep.subr.bf16.mxu0 0
        %810 = vmatpush1.bf16.msra.mxu0 %v798
        %811 = vmatprep.subr.bf16.mxu0 0
        %812 = vmatpush1.bf16.msra.mxu0 %v799
        %813 = vmatprep.subr.bf16.mxu0 0
        %814 = vmatpush1.bf16.msra.mxu0 %v800
        %815 = vmatprep.subr.bf16.mxu0 0
        %816 = vmatpush1.bf16.msra.mxu0 %v801
        %817 = vmatprep.subr.bf16.mxu0 0
        %818 = vmatpush1.bf16.msra.mxu0 %v802
        %819 = vmatprep.subr.bf16.mxu0 0
        %820 = vmatpush1.bf16.msra.mxu0 0
        %821 = vmatprep.subr.bf16.mxu0 0
        %822 = vmatpush1.bf16.msra.mxu0 0
        %823 = vmatprep.subr.bf16.mxu0 0
        %824 = vmatpush1.bf16.msra.mxu0 0
        %825 = vmatprep.subr.bf16.mxu0 0
        %826 = vmatpush1.bf16.msra.mxu0 0
        %827 = vmatprep.subr.bf16.mxu0 0
        %828 = vmatpush1.bf16.msra.mxu0 0
        %829 = vmatprep.subr.bf16.mxu0 0
        %830 = vmatpush1.bf16.msra.mxu0 0
        %831 = vmatprep.subr.bf16.mxu0 0
        %832 = vmatpush1.bf16.msra.mxu0 0
        %833 = vmatprep.subr.bf16.mxu0 0
        %834 = vmatpush1.bf16.msra.mxu0 0
        %835 = vmatprep.mubr.bf16.mxu0 0
        %836 = vmatmul.mubr.bf16.gmra.mrb[0].mxu0 %v497
        %v837 = vpop.f32.mrb[0].mxu0
        %v838 = vadd.f32 0.0, %v837
        %v839 = vpop.f32.mrb[0].mxu0
        %v840 = vpop.f32.mrb[0].mxu0
        %v841 = vadd.f32 0.0, %v840
        %v842 = vpop.f32.mrb[0].mxu0
        %843 = vmatprep.mubr.bf16.mxu0 0
        %844 = vmatmul.mubr.bf16.gmra.mrb[0].mxu0 %v498
        %v845 = vpop.f32.mrb[0].mxu0
        %v846 = vadd.f32 0.0, %v845
        %v847 = vpop.f32.mrb[0].mxu0
        %v848 = vpop.f32.mrb[0].mxu0
        %v849 = vadd.f32 0.0, %v848
        %v850 = vpop.f32.mrb[0].mxu0
        %851 = vmatprep.mubr.bf16.mxu0 0
        %852 = vmatmul.mubr.bf16.gmra.mrb[0].mxu0 %v499
        %v853 = vpop.f32.mrb[0].mxu0
        %v854 = vadd.f32 0.0, %v853
        %v855 = vpop.f32.mrb[0].mxu0
        %v856 = vpop.f32.mrb[0].mxu0
        %v857 = vadd.f32 0.0, %v856
        %v858 = vpop.f32.mrb[0].mxu0
        %859 = vmatprep.mubr.bf16.mxu0 0
        %860 = vmatmul.mubr.bf16.gmra.mrb[0].mxu0 %v500
        %v861 = vpop.f32.mrb[0].mxu0
        %v862 = vadd.f32 0.0, %v861
        %v863 = vpop.f32.mrb[0].mxu0
        %v864 = vpop.f32.mrb[0].mxu0
        %v865 = vadd.f32 0.0, %v864
        %v866 = vpop.f32.mrb[0].mxu0
        %867 = vmatprep.mubr.bf16.mxu0 0
        %868 = vmatmul.mubr.bf16.gmra.mrb[0].mxu0 %v501
        %v869 = vpop.f32.mrb[0].mxu0
        %v870 = vadd.f32 0.0, %v869
        %v871 = vpop.f32.mrb[0].mxu0
        %v872 = vpop.f32.mrb[0].mxu0
        %v873 = vadd.f32 0.0, %v872
        %v874 = vpop.f32.mrb[0].mxu0
        %875 = vmatprep.mubr.bf16.mxu0 0
        %876 = vmatmul.mubr.bf16.gmra.mrb[0].mxu0 %v502
        %v877 = vpop.f32.mrb[0].mxu0
        %v878 = vadd.f32 0.0, %v877
        %v879 = vpop.f32.mrb[0].mxu0
        %v880 = vpop.f32.mrb[0].mxu0
        %v881 = vadd.f32 0.0, %v880
        %v882 = vpop.f32.mrb[0].mxu0
        %883 = vmatprep.mubr.bf16.mxu0 0
        %884 = vmatmul.mubr.bf16.gmra.mrb[0].mxu0 %v503
        %v885 = vpop.f32.mrb[0].mxu0
        %v886 = vadd.f32 0.0, %v885
        %v887 = vpop.f32.mrb[0].mxu0
        %v888 = vpop.f32.mrb[0].mxu0
        %v889 = vadd.f32 0.0, %v888
        %v890 = vpop.f32.mrb[0].mxu0
        %891 = vmatprep.mubr.bf16.mxu0 0
        %892 = vmatmul.mubr.bf16.gmra.mrb[0].mxu0 %v504
        %v893 = vpop.f32.mrb[0].mxu0
        %v894 = vadd.f32 0.0, %v893
        %v895 = vpop.f32.mrb[0].mxu0
        %v896 = vpop.f32.mrb[0].mxu0
        %v897 = vadd.f32 0.0, %v896
        %v898 = vpop.f32.mrb[0].mxu0
        %899 = vdwg.mxu0
        %s900 = scalar_lea.vmem %s3, 1
        %v901 = vld [vmem:[%s900] sm:$0x1]
        %v903 = vlaneseq
        %v904 = vshrl.u32 %v903, 7
        %v905 = vsub.s32 0, %v904
        %v906 = vrot.slane %v901, %v905
        %v908 = vadd.f32 %v838, %v906
        %v909 = vadd.f32 %v841, %v906
        %v910 = vadd.f32 %v846, %v906
        %v911 = vadd.f32 %v849, %v906
        %v912 = vadd.f32 %v854, %v906
        %v913 = vadd.f32 %v857, %v906
        %v914 = vadd.f32 %v862, %v906
        %v915 = vadd.f32 %v865, %v906
        %v916 = vadd.f32 %v870, %v906
        %v917 = vadd.f32 %v873, %v906
        %v918 = vadd.f32 %v878, %v906
        %v919 = vadd.f32 %v881, %v906
        %v920 = vadd.f32 %v886, %v906
        %v921 = vadd.f32 %v889, %v906
        %v922 = vadd.f32 %v894, %v906
        %v923 = vadd.f32 %v897, %v906
        %v924 = vmax.f32 %v908, 0.0
        %v925 = vmax.f32 %v909, 0.0
        %v926 = vmax.f32 %v910, 0.0
        %v927 = vmax.f32 %v911, 0.0
        %v928 = vmax.f32 %v912, 0.0
        %v929 = vmax.f32 %v913, 0.0
        %v930 = vmax.f32 %v914, 0.0
        %v931 = vmax.f32 %v915, 0.0
        %v932 = vmax.f32 %v916, 0.0
        %v933 = vmax.f32 %v917, 0.0
        %v934 = vmax.f32 %v918, 0.0
        %v935 = vmax.f32 %v919, 0.0
        %v936 = vmax.f32 %v920, 0.0
        %v937 = vmax.f32 %v921, 0.0
        %v938 = vmax.f32 %v922, 0.0
        %v939 = vmax.f32 %v923, 0.0
        %v940 = vpack.c.bf16 %v925, %v924
        %v941 = vpack.c.bf16 %v927, %v926
        %v942 = vpack.c.bf16 %v929, %v928
        %v943 = vpack.c.bf16 %v931, %v930
        %v944 = vpack.c.bf16 %v933, %v932
        %v945 = vpack.c.bf16 %v935, %v934
        %v946 = vpack.c.bf16 %v937, %v936
        %v947 = vpack.c.bf16 %v939, %v938
        %s948 = scalar_lea.vmem %s2, 32
        %v949 = vld [vmem:[%s948] sm:$0xf]
        %v950 = vld [vmem:[%s948 + $0x4] sm:$0xf]
        %v951 = vld [vmem:[%s948 + $0x8] sm:$0xf]
        %v952 = vld [vmem:[%s948 + $0xc] sm:$0xf]
        %v957 = vunpack.c.l.b16 %v949
        %v958 = vunpack.c.l.b16 %v950
        %v959 = vunpack.c.l.b16 %v951
        %v960 = vunpack.c.l.b16 %v952
        %v961 = vpack.c.b16 %v958, %v957
        %v962 = vpack.c.b16 %v960, %v959
        %v966 = vsel %vm335, %v940, 0
        %v969 = vsel %vm335, %v941, 0
        %v972 = vsel %vm335, %v942, 0
        %v975 = vsel %vm335, %v943, 0
        %v978 = vsel %vm335, %v944, 0
        %v981 = vsel %vm335, %v945, 0
        %v984 = vsel %vm335, %v946, 0
        %v987 = vsel %vm335, %v947, 0
        %989 = vmatprep.subr.bf16.mxu0 0
        %990 = vmatpush1.bf16.msra.mxu0 %v961
        %991 = vmatprep.subr.bf16.mxu0 0
        %992 = vmatpush1.bf16.msra.mxu0 %v962
        %993 = vmatprep.subr.bf16.mxu0 0
        %994 = vmatpush1.bf16.msra.mxu0 0
        %995 = vmatprep.subr.bf16.mxu0 0
        %996 = vmatpush1.bf16.msra.mxu0 0
        %997 = vmatprep.subr.bf16.mxu0 0
        %998 = vmatpush1.bf16.msra.mxu0 0
        %999 = vmatprep.subr.bf16.mxu0 0
        %1000 = vmatpush1.bf16.msra.mxu0 0
        %1001 = vmatprep.subr.bf16.mxu0 0
        %1002 = vmatpush1.bf16.msra.mxu0 0
        %1003 = vmatprep.subr.bf16.mxu0 0
        %1004 = vmatpush1.bf16.msra.mxu0 0
        %1005 = vmatprep.subr.bf16.mxu0 0
        %1006 = vmatpush1.bf16.msra.mxu0 0
        %1007 = vmatprep.subr.bf16.mxu0 0
        %1008 = vmatpush1.bf16.msra.mxu0 0
        %1009 = vmatprep.subr.bf16.mxu0 0
        %1010 = vmatpush1.bf16.msra.mxu0 0
        %1011 = vmatprep.subr.bf16.mxu0 0
        %1012 = vmatpush1.bf16.msra.mxu0 0
        %1013 = vmatprep.subr.bf16.mxu0 0
        %1014 = vmatpush1.bf16.msra.mxu0 0
        %1015 = vmatprep.subr.bf16.mxu0 0
        %1016 = vmatpush1.bf16.msra.mxu0 0
        %1017 = vmatprep.subr.bf16.mxu0 0
        %1018 = vmatpush1.bf16.msra.mxu0 0
        %1019 = vmatprep.subr.bf16.mxu0 0
        %1020 = vmatpush1.bf16.msra.mxu0 0
        %1021 = vmatprep.mubr.bf16.mxu0 0
        %1022 = vmatmul.mubr.bf16.gmra.mrb[0].mxu0 %v966
        %v1023 = vpop.f32.mrb[0].mxu0
        %v1024 = vadd.f32 0.0, %v1023
        %v1025 = vpop.f32.mrb[0].mxu0
        %v1026 = vpop.f32.mrb[0].mxu0
        %v1027 = vadd.f32 0.0, %v1026
        %v1028 = vpop.f32.mrb[0].mxu0
        %1029 = vmatprep.mubr.bf16.mxu0 0
        %1030 = vmatmul.mubr.bf16.gmra.mrb[0].mxu0 %v969
        %v1031 = vpop.f32.mrb[0].mxu0
        %v1032 = vadd.f32 0.0, %v1031
        %v1033 = vpop.f32.mrb[0].mxu0
        %v1034 = vpop.f32.mrb[0].mxu0
        %v1035 = vadd.f32 0.0, %v1034
        %v1036 = vpop.f32.mrb[0].mxu0
        %1037 = vmatprep.mubr.bf16.mxu0 0
        %1038 = vmatmul.mubr.bf16.gmra.mrb[0].mxu0 %v972
        %v1039 = vpop.f32.mrb[0].mxu0
        %v1040 = vadd.f32 0.0, %v1039
        %v1041 = vpop.f32.mrb[0].mxu0
        %v1042 = vpop.f32.mrb[0].mxu0
        %v1043 = vadd.f32 0.0, %v1042
        %v1044 = vpop.f32.mrb[0].mxu0
        %1045 = vmatprep.mubr.bf16.mxu0 0
        %1046 = vmatmul.mubr.bf16.gmra.mrb[0].mxu0 %v975
        %v1047 = vpop.f32.mrb[0].mxu0
        %v1048 = vadd.f32 0.0, %v1047
        %v1049 = vpop.f32.mrb[0].mxu0
        %v1050 = vpop.f32.mrb[0].mxu0
        %v1051 = vadd.f32 0.0, %v1050
        %v1052 = vpop.f32.mrb[0].mxu0
        %1053 = vmatprep.mubr.bf16.mxu0 0
        %1054 = vmatmul.mubr.bf16.gmra.mrb[0].mxu0 %v978
        %v1055 = vpop.f32.mrb[0].mxu0
        %v1056 = vadd.f32 0.0, %v1055
        %v1057 = vpop.f32.mrb[0].mxu0
        %v1058 = vpop.f32.mrb[0].mxu0
        %v1059 = vadd.f32 0.0, %v1058
        %v1060 = vpop.f32.mrb[0].mxu0
        %1061 = vmatprep.mubr.bf16.mxu0 0
        %1062 = vmatmul.mubr.bf16.gmra.mrb[0].mxu0 %v981
        %v1063 = vpop.f32.mrb[0].mxu0
        %v1064 = vadd.f32 0.0, %v1063
        %v1065 = vpop.f32.mrb[0].mxu0
        %v1066 = vpop.f32.mrb[0].mxu0
        %v1067 = vadd.f32 0.0, %v1066
        %v1068 = vpop.f32.mrb[0].mxu0
        %1069 = vmatprep.mubr.bf16.mxu0 0
        %1070 = vmatmul.mubr.bf16.gmra.mrb[0].mxu0 %v984
        %v1071 = vpop.f32.mrb[0].mxu0
        %v1072 = vadd.f32 0.0, %v1071
        %v1073 = vpop.f32.mrb[0].mxu0
        %v1074 = vpop.f32.mrb[0].mxu0
        %v1075 = vadd.f32 0.0, %v1074
        %v1076 = vpop.f32.mrb[0].mxu0
        %1077 = vmatprep.mubr.bf16.mxu0 0
        %1078 = vmatmul.mubr.bf16.gmra.mrb[0].mxu0 %v987
        %v1079 = vpop.f32.mrb[0].mxu0
        %v1080 = vadd.f32 0.0, %v1079
        %v1081 = vpop.f32.mrb[0].mxu0
        %v1082 = vpop.f32.mrb[0].mxu0
        %v1083 = vadd.f32 0.0, %v1082
        %v1084 = vpop.f32.mrb[0].mxu0
        %1085 = vdwg.mxu0
        %v1086 = vpack.c.bf16 %v1027, %v1024
        %v1087 = vpack.c.bf16 %v1035, %v1032
        %v1088 = vpack.c.bf16 %v1043, %v1040
        %v1089 = vpack.c.bf16 %v1051, %v1048
        %v1090 = vpack.c.bf16 %v1059, %v1056
        %v1091 = vpack.c.bf16 %v1067, %v1064
        %v1092 = vpack.c.bf16 %v1075, %v1072
        %v1093 = vpack.c.bf16 %v1083, %v1080
        %1094 = vmatprep.subr.bf16.mxu0 0
        %1095 = vmatpush1.bf16.msra.mxu0 %v1086
        %1096 = vmatprep.subr.bf16.mxu0 0
        %1097 = vmatpush1.bf16.msra.mxu0 %v1087
        %1098 = vmatprep.subr.bf16.mxu0 0
        %1099 = vmatpush1.bf16.msra.mxu0 %v1088
        %1100 = vmatprep.subr.bf16.mxu0 0
        %1101 = vmatpush1.bf16.msra.mxu0 %v1089
        %1102 = vmatprep.subr.bf16.mxu0 0
        %1103 = vmatpush1.bf16.msra.mxu0 %v1090
        %1104 = vmatprep.subr.bf16.mxu0 0
        %1105 = vmatpush1.bf16.msra.mxu0 %v1091
        %1106 = vmatprep.subr.bf16.mxu0 0
        %1107 = vmatpush1.bf16.msra.mxu0 %v1092
        %1108 = vmatprep.subr.bf16.mxu0 0
        %1109 = vmatpush1.bf16.msra.mxu0 %v1093
        %1110 = vmatprep.subr.bf16.mxu0 0
        %1111 = vmatpush1.bf16.msra.mxu0 0
        %1112 = vmatprep.subr.bf16.mxu0 0
        %1113 = vmatpush1.bf16.msra.mxu0 0
        %1114 = vmatprep.subr.bf16.mxu0 0
        %1115 = vmatpush1.bf16.msra.mxu0 0
        %1116 = vmatprep.subr.bf16.mxu0 0
        %1117 = vmatpush1.bf16.msra.mxu0 0
        %1118 = vmatprep.subr.bf16.mxu0 0
        %1119 = vmatpush1.bf16.msra.mxu0 0
        %1120 = vmatprep.subr.bf16.mxu0 0
        %1121 = vmatpush1.bf16.msra.mxu0 0
        %1122 = vmatprep.subr.bf16.mxu0 0
        %1123 = vmatpush1.bf16.msra.mxu0 0
        %1124 = vmatprep.subr.bf16.mxu0 0
        %1125 = vmatpush1.bf16.msra.mxu0 0
        %1126 = vmatprep.mubr.bf16.mxu0 0
        %1127 = vmatmul.mubr.bf16.gmra.mrb[0].mxu0 %v497
        %v1128 = vpop.f32.mrb[0].mxu0
        %v1129 = vadd.f32 0.0, %v1128
        %v1130 = vpop.f32.mrb[0].mxu0
        %v1131 = vpop.f32.mrb[0].mxu0
        %v1132 = vadd.f32 0.0, %v1131
        %v1133 = vpop.f32.mrb[0].mxu0
        %1134 = vmatprep.mubr.bf16.mxu0 0
        %1135 = vmatmul.mubr.bf16.gmra.mrb[0].mxu0 %v498
        %v1136 = vpop.f32.mrb[0].mxu0
        %v1137 = vadd.f32 0.0, %v1136
        %v1138 = vpop.f32.mrb[0].mxu0
        %v1139 = vpop.f32.mrb[0].mxu0
        %v1140 = vadd.f32 0.0, %v1139
        %v1141 = vpop.f32.mrb[0].mxu0
        %1142 = vmatprep.mubr.bf16.mxu0 0
        %1143 = vmatmul.mubr.bf16.gmra.mrb[0].mxu0 %v499
        %v1144 = vpop.f32.mrb[0].mxu0
        %v1145 = vadd.f32 0.0, %v1144
        %v1146 = vpop.f32.mrb[0].mxu0
        %v1147 = vpop.f32.mrb[0].mxu0
        %v1148 = vadd.f32 0.0, %v1147
        %v1149 = vpop.f32.mrb[0].mxu0
        %1150 = vmatprep.mubr.bf16.mxu0 0
        %1151 = vmatmul.mubr.bf16.gmra.mrb[0].mxu0 %v500
        %v1152 = vpop.f32.mrb[0].mxu0
        %v1153 = vadd.f32 0.0, %v1152
        %v1154 = vpop.f32.mrb[0].mxu0
        %v1155 = vpop.f32.mrb[0].mxu0
        %v1156 = vadd.f32 0.0, %v1155
        %v1157 = vpop.f32.mrb[0].mxu0
        %1158 = vmatprep.mubr.bf16.mxu0 0
        %1159 = vmatmul.mubr.bf16.gmra.mrb[0].mxu0 %v501
        %v1160 = vpop.f32.mrb[0].mxu0
        %v1161 = vadd.f32 0.0, %v1160
        %v1162 = vpop.f32.mrb[0].mxu0
        %v1163 = vpop.f32.mrb[0].mxu0
        %v1164 = vadd.f32 0.0, %v1163
        %v1165 = vpop.f32.mrb[0].mxu0
        %1166 = vmatprep.mubr.bf16.mxu0 0
        %1167 = vmatmul.mubr.bf16.gmra.mrb[0].mxu0 %v502
        %v1168 = vpop.f32.mrb[0].mxu0
        %v1169 = vadd.f32 0.0, %v1168
        %v1170 = vpop.f32.mrb[0].mxu0
        %v1171 = vpop.f32.mrb[0].mxu0
        %v1172 = vadd.f32 0.0, %v1171
        %v1173 = vpop.f32.mrb[0].mxu0
        %1174 = vmatprep.mubr.bf16.mxu0 0
        %1175 = vmatmul.mubr.bf16.gmra.mrb[0].mxu0 %v503
        %v1176 = vpop.f32.mrb[0].mxu0
        %v1177 = vadd.f32 0.0, %v1176
        %v1178 = vpop.f32.mrb[0].mxu0
        %v1179 = vpop.f32.mrb[0].mxu0
        %v1180 = vadd.f32 0.0, %v1179
        %v1181 = vpop.f32.mrb[0].mxu0
        %1182 = vmatprep.mubr.bf16.mxu0 0
        %1183 = vmatmul.mubr.bf16.gmra.mrb[0].mxu0 %v504
        %v1184 = vpop.f32.mrb[0].mxu0
        %v1185 = vadd.f32 0.0, %v1184
        %v1186 = vpop.f32.mrb[0].mxu0
        %v1187 = vpop.f32.mrb[0].mxu0
        %v1188 = vadd.f32 0.0, %v1187
        %v1189 = vpop.f32.mrb[0].mxu0
        %1190 = vdwg.mxu0
        %s1191 = scalar_lea.vmem %s3, 2
        %v1192 = vld [vmem:[%s1191] sm:$0x1]
        %v1194 = vlaneseq
        %v1195 = vshrl.u32 %v1194, 7
        %v1196 = vsub.s32 0, %v1195
        %v1197 = vrot.slane %v1192, %v1196
        %v1199 = vadd.f32 %v1129, %v1197
        %v1200 = vadd.f32 %v1132, %v1197
        %v1201 = vadd.f32 %v1137, %v1197
        %v1202 = vadd.f32 %v1140, %v1197
        %v1203 = vadd.f32 %v1145, %v1197
        %v1204 = vadd.f32 %v1148, %v1197
        %v1205 = vadd.f32 %v1153, %v1197
        %v1206 = vadd.f32 %v1156, %v1197
        %v1207 = vadd.f32 %v1161, %v1197
        %v1208 = vadd.f32 %v1164, %v1197
        %v1209 = vadd.f32 %v1169, %v1197
        %v1210 = vadd.f32 %v1172, %v1197
        %v1211 = vadd.f32 %v1177, %v1197
        %v1212 = vadd.f32 %v1180, %v1197
        %v1213 = vadd.f32 %v1185, %v1197
        %v1214 = vadd.f32 %v1188, %v1197
        %v1215 = vmax.f32 %v1199, 0.0
        %v1216 = vmax.f32 %v1200, 0.0
        %v1217 = vmax.f32 %v1201, 0.0
        %v1218 = vmax.f32 %v1202, 0.0
        %v1219 = vmax.f32 %v1203, 0.0
        %v1220 = vmax.f32 %v1204, 0.0
        %v1221 = vmax.f32 %v1205, 0.0
        %v1222 = vmax.f32 %v1206, 0.0
        %v1223 = vmax.f32 %v1207, 0.0
        %v1224 = vmax.f32 %v1208, 0.0
        %v1225 = vmax.f32 %v1209, 0.0
        %v1226 = vmax.f32 %v1210, 0.0
        %v1227 = vmax.f32 %v1211, 0.0
        %v1228 = vmax.f32 %v1212, 0.0
        %v1229 = vmax.f32 %v1213, 0.0
        %v1230 = vmax.f32 %v1214, 0.0
        %v1231 = vsel %vm335, %v295, 0.0
        %v1232 = vsel %vm335, %v296, 0.0
        %v1233 = vadd.f32 %v1231, %v1232
        %v1234 = vrot.slane %v1233, 4
        %v1235 = vadd.f32 %v1233, %v1234
        %v1236 = vrot.slane %v1235, 2
        %v1237 = vadd.f32 %v1235, %v1236
        %v1238 = vrot.slane %v1237, 1
        %v1239 = vadd.f32 %v1237, %v1238
        %v1240 = vsel %vm335, %v297, 0.0
        %v1241 = vsel %vm335, %v298, 0.0
        %v1242 = vadd.f32 %v1240, %v1241
        %v1243 = vrot.slane %v1242, 4
        %v1244 = vadd.f32 %v1242, %v1243
        %v1245 = vrot.slane %v1244, 2
        %v1246 = vadd.f32 %v1244, %v1245
        %v1247 = vrot.slane %v1246, 1
        %v1248 = vadd.f32 %v1246, %v1247
        %v1249 = vsel %vm335, %v299, 0.0
        %v1250 = vsel %vm335, %v300, 0.0
        %v1251 = vadd.f32 %v1249, %v1250
        %v1252 = vrot.slane %v1251, 4
        %v1253 = vadd.f32 %v1251, %v1252
        %v1254 = vrot.slane %v1253, 2
        %v1255 = vadd.f32 %v1253, %v1254
        %v1256 = vrot.slane %v1255, 1
        %v1257 = vadd.f32 %v1255, %v1256
        %v1258 = vsel %vm335, %v301, 0.0
        %v1259 = vsel %vm335, %v302, 0.0
        %v1260 = vadd.f32 %v1258, %v1259
        %v1261 = vrot.slane %v1260, 4
        %v1262 = vadd.f32 %v1260, %v1261
        %v1263 = vrot.slane %v1262, 2
        %v1264 = vadd.f32 %v1262, %v1263
        %v1265 = vrot.slane %v1264, 1
        %v1266 = vadd.f32 %v1264, %v1265
        %v1267 = vsel %vm335, %v303, 0.0
        %v1268 = vsel %vm335, %v304, 0.0
        %v1269 = vadd.f32 %v1267, %v1268
        %v1270 = vrot.slane %v1269, 4
        %v1271 = vadd.f32 %v1269, %v1270
        %v1272 = vrot.slane %v1271, 2
        %v1273 = vadd.f32 %v1271, %v1272
        %v1274 = vrot.slane %v1273, 1
        %v1275 = vadd.f32 %v1273, %v1274
        %v1276 = vsel %vm335, %v305, 0.0
        %v1277 = vsel %vm335, %v306, 0.0
        %v1278 = vadd.f32 %v1276, %v1277
        %v1279 = vrot.slane %v1278, 4
        %v1280 = vadd.f32 %v1278, %v1279
        %v1281 = vrot.slane %v1280, 2
        %v1282 = vadd.f32 %v1280, %v1281
        %v1283 = vrot.slane %v1282, 1
        %v1284 = vadd.f32 %v1282, %v1283
        %v1285 = vsel %vm335, %v307, 0.0
        %v1286 = vsel %vm335, %v308, 0.0
        %v1287 = vadd.f32 %v1285, %v1286
        %v1288 = vrot.slane %v1287, 4
        %v1289 = vadd.f32 %v1287, %v1288
        %v1290 = vrot.slane %v1289, 2
        %v1291 = vadd.f32 %v1289, %v1290
        %v1292 = vrot.slane %v1291, 1
        %v1293 = vadd.f32 %v1291, %v1292
        %v1294 = vsel %vm335, %v309, 0.0
        %v1295 = vsel %vm335, %v310, 0.0
        %v1296 = vadd.f32 %v1294, %v1295
        %v1297 = vrot.slane %v1296, 4
        %v1298 = vadd.f32 %v1296, %v1297
        %v1299 = vrot.slane %v1298, 2
        %v1300 = vadd.f32 %v1298, %v1299
        %v1301 = vrot.slane %v1300, 1
        %v1302 = vadd.f32 %v1300, %v1301
        %v1303 = vmul.f32 %v295, %v295
        %v1304 = vmul.f32 %v296, %v296
        %v1305 = vmul.f32 %v297, %v297
        %v1306 = vmul.f32 %v298, %v298
        %v1307 = vmul.f32 %v299, %v299
        %v1308 = vmul.f32 %v300, %v300
        %v1309 = vmul.f32 %v301, %v301
        %v1310 = vmul.f32 %v302, %v302
        %v1311 = vmul.f32 %v303, %v303
        %v1312 = vmul.f32 %v304, %v304
        %v1313 = vmul.f32 %v305, %v305
        %v1314 = vmul.f32 %v306, %v306
        %v1315 = vmul.f32 %v307, %v307
        %v1316 = vmul.f32 %v308, %v308
        %v1317 = vmul.f32 %v309, %v309
        %v1318 = vmul.f32 %v310, %v310
        %v1319 = vsel %vm335, %v1303, 0.0
        %v1320 = vsel %vm335, %v1304, 0.0
        %v1321 = vadd.f32 %v1319, %v1320
        %v1322 = vrot.slane %v1321, 4
        %v1323 = vadd.f32 %v1321, %v1322
        %v1324 = vrot.slane %v1323, 2
        %v1325 = vadd.f32 %v1323, %v1324
        %v1326 = vrot.slane %v1325, 1
        %v1327 = vadd.f32 %v1325, %v1326
        %v1328 = vsel %vm335, %v1305, 0.0
        %v1329 = vsel %vm335, %v1306, 0.0
        %v1330 = vadd.f32 %v1328, %v1329
        %v1331 = vrot.slane %v1330, 4
        %v1332 = vadd.f32 %v1330, %v1331
        %v1333 = vrot.slane %v1332, 2
        %v1334 = vadd.f32 %v1332, %v1333
        %v1335 = vrot.slane %v1334, 1
        %v1336 = vadd.f32 %v1334, %v1335
        %v1337 = vsel %vm335, %v1307, 0.0
        %v1338 = vsel %vm335, %v1308, 0.0
        %v1339 = vadd.f32 %v1337, %v1338
        %v1340 = vrot.slane %v1339, 4
        %v1341 = vadd.f32 %v1339, %v1340
        %v1342 = vrot.slane %v1341, 2
        %v1343 = vadd.f32 %v1341, %v1342
        %v1344 = vrot.slane %v1343, 1
        %v1345 = vadd.f32 %v1343, %v1344
        %v1346 = vsel %vm335, %v1309, 0.0
        %v1347 = vsel %vm335, %v1310, 0.0
        %v1348 = vadd.f32 %v1346, %v1347
        %v1349 = vrot.slane %v1348, 4
        %v1350 = vadd.f32 %v1348, %v1349
        %v1351 = vrot.slane %v1350, 2
        %v1352 = vadd.f32 %v1350, %v1351
        %v1353 = vrot.slane %v1352, 1
        %v1354 = vadd.f32 %v1352, %v1353
        %v1355 = vsel %vm335, %v1311, 0.0
        %v1356 = vsel %vm335, %v1312, 0.0
        %v1357 = vadd.f32 %v1355, %v1356
        %v1358 = vrot.slane %v1357, 4
        %v1359 = vadd.f32 %v1357, %v1358
        %v1360 = vrot.slane %v1359, 2
        %v1361 = vadd.f32 %v1359, %v1360
        %v1362 = vrot.slane %v1361, 1
        %v1363 = vadd.f32 %v1361, %v1362
        %v1364 = vsel %vm335, %v1313, 0.0
        %v1365 = vsel %vm335, %v1314, 0.0
        %v1366 = vadd.f32 %v1364, %v1365
        %v1367 = vrot.slane %v1366, 4
        %v1368 = vadd.f32 %v1366, %v1367
        %v1369 = vrot.slane %v1368, 2
        %v1370 = vadd.f32 %v1368, %v1369
        %v1371 = vrot.slane %v1370, 1
        %v1372 = vadd.f32 %v1370, %v1371
        %v1373 = vsel %vm335, %v1315, 0.0
        %v1374 = vsel %vm335, %v1316, 0.0
        %v1375 = vadd.f32 %v1373, %v1374
        %v1376 = vrot.slane %v1375, 4
        %v1377 = vadd.f32 %v1375, %v1376
        %v1378 = vrot.slane %v1377, 2
        %v1379 = vadd.f32 %v1377, %v1378
        %v1380 = vrot.slane %v1379, 1
        %v1381 = vadd.f32 %v1379, %v1380
        %v1382 = vsel %vm335, %v1317, 0.0
        %v1383 = vsel %vm335, %v1318, 0.0
        %v1384 = vadd.f32 %v1382, %v1383
        %v1385 = vrot.slane %v1384, 4
        %v1386 = vadd.f32 %v1384, %v1385
        %v1387 = vrot.slane %v1386, 2
        %v1388 = vadd.f32 %v1386, %v1387
        %v1389 = vrot.slane %v1388, 1
        %v1390 = vadd.f32 %v1388, %v1389
        %v1391 = vmul.f32 %v1239, 0.0625
        %v1392 = vmul.f32 %v1248, 0.0625
        %v1393 = vmul.f32 %v1257, 0.0625
        %v1394 = vmul.f32 %v1266, 0.0625
        %v1395 = vmul.f32 %v1275, 0.0625
        %v1396 = vmul.f32 %v1284, 0.0625
        %v1397 = vmul.f32 %v1293, 0.0625
        %v1398 = vmul.f32 %v1302, 0.0625
        %v1399 = vmul.f32 %v1327, 0.0625
        %v1400 = vmul.f32 %v1336, 0.0625
        %v1401 = vmul.f32 %v1345, 0.0625
        %v1402 = vmul.f32 %v1354, 0.0625
        %v1403 = vmul.f32 %v1363, 0.0625
        %v1404 = vmul.f32 %v1372, 0.0625
        %v1405 = vmul.f32 %v1381, 0.0625
        %v1406 = vmul.f32 %v1390, 0.0625
        %v1407 = vmul.f32 %v1391, %v1391
        %v1408 = vmul.f32 %v1392, %v1392
        %v1409 = vmul.f32 %v1393, %v1393
        %v1410 = vmul.f32 %v1394, %v1394
        %v1411 = vmul.f32 %v1395, %v1395
        %v1412 = vmul.f32 %v1396, %v1396
        %v1413 = vmul.f32 %v1397, %v1397
        %v1414 = vmul.f32 %v1398, %v1398
        %v1415 = vsub.f32 %v1399, %v1407
        %v1416 = vsub.f32 %v1400, %v1408
        %v1417 = vsub.f32 %v1401, %v1409
        %v1418 = vsub.f32 %v1402, %v1410
        %v1419 = vsub.f32 %v1403, %v1411
        %v1420 = vsub.f32 %v1404, %v1412
        %v1421 = vsub.f32 %v1405, %v1413
        %v1422 = vsub.f32 %v1406, %v1414
        %v1423 = vmax.f32 %v1415, 0.0
        %v1424 = vmax.f32 %v1416, 0.0
        %v1425 = vmax.f32 %v1417, 0.0
        %v1426 = vmax.f32 %v1418, 0.0
        %v1427 = vmax.f32 %v1419, 0.0
        %v1428 = vmax.f32 %v1420, 0.0
        %v1429 = vmax.f32 %v1421, 0.0
        %v1430 = vmax.f32 %v1422, 0.0
        %v1431 = vsub.f32 %v295, %v1391
        %v1432 = vsub.f32 %v296, %v1391
        %v1433 = vsub.f32 %v297, %v1392
        %v1434 = vsub.f32 %v298, %v1392
        %v1435 = vsub.f32 %v299, %v1393
        %v1436 = vsub.f32 %v300, %v1393
        %v1437 = vsub.f32 %v301, %v1394
        %v1438 = vsub.f32 %v302, %v1394
        %v1439 = vsub.f32 %v303, %v1395
        %v1440 = vsub.f32 %v304, %v1395
        %v1441 = vsub.f32 %v305, %v1396
        %v1442 = vsub.f32 %v306, %v1396
        %v1443 = vsub.f32 %v307, %v1397
        %v1444 = vsub.f32 %v308, %v1397
        %v1445 = vsub.f32 %v309, %v1398
        %v1446 = vsub.f32 %v310, %v1398
        %v1447 = vadd.f32 %v1423, 1e-05
        %v1448 = vadd.f32 %v1424, 1e-05
        %v1449 = vadd.f32 %v1425, 1e-05
        %v1450 = vadd.f32 %v1426, 1e-05
        %v1451 = vadd.f32 %v1427, 1e-05
        %v1452 = vadd.f32 %v1428, 1e-05
        %v1453 = vadd.f32 %v1429, 1e-05
        %v1454 = vadd.f32 %v1430, 1e-05
        %v1455 = vrsqrt.pop %v1447
        %v1456 = vrsqrt.pop %v1448
        %v1457 = vrsqrt.pop %v1449
        %v1458 = vrsqrt.pop %v1450
        %v1459 = vrsqrt.pop %v1451
        %v1460 = vrsqrt.pop %v1452
        %v1461 = vrsqrt.pop %v1453
        %v1462 = vrsqrt.pop %v1454
        %v1463 = vmul.f32 %v1431, %v1455
        %v1464 = vmul.f32 %v1432, %v1455
        %v1465 = vmul.f32 %v1433, %v1456
        %v1466 = vmul.f32 %v1434, %v1456
        %v1467 = vmul.f32 %v1435, %v1457
        %v1468 = vmul.f32 %v1436, %v1457
        %v1469 = vmul.f32 %v1437, %v1458
        %v1470 = vmul.f32 %v1438, %v1458
        %v1471 = vmul.f32 %v1439, %v1459
        %v1472 = vmul.f32 %v1440, %v1459
        %v1473 = vmul.f32 %v1441, %v1460
        %v1474 = vmul.f32 %v1442, %v1460
        %v1475 = vmul.f32 %v1443, %v1461
        %v1476 = vmul.f32 %v1444, %v1461
        %v1477 = vmul.f32 %v1445, %v1462
        %v1478 = vmul.f32 %v1446, %v1462
        %v1479 = vpack.c.bf16 %v1464, %v1463
        %v1480 = vpack.c.bf16 %v1466, %v1465
        %v1481 = vpack.c.bf16 %v1468, %v1467
        %v1482 = vpack.c.bf16 %v1470, %v1469
        %v1483 = vpack.c.bf16 %v1472, %v1471
        %v1484 = vpack.c.bf16 %v1474, %v1473
        %v1485 = vpack.c.bf16 %v1476, %v1475
        %v1486 = vpack.c.bf16 %v1478, %v1477
        %v1487 = vsel %vm335, %v633, 0.0
        %v1488 = vsel %vm335, %v634, 0.0
        %v1489 = vadd.f32 %v1487, %v1488
        %v1490 = vrot.slane %v1489, 4
        %v1491 = vadd.f32 %v1489, %v1490
        %v1492 = vrot.slane %v1491, 2
        %v1493 = vadd.f32 %v1491, %v1492
        %v1494 = vrot.slane %v1493, 1
        %v1495 = vadd.f32 %v1493, %v1494
        %v1496 = vsel %vm335, %v635, 0.0
        %v1497 = vsel %vm335, %v636, 0.0
        %v1498 = vadd.f32 %v1496, %v1497
        %v1499 = vrot.slane %v1498, 4
        %v1500 = vadd.f32 %v1498, %v1499
        %v1501 = vrot.slane %v1500, 2
        %v1502 = vadd.f32 %v1500, %v1501
        %v1503 = vrot.slane %v1502, 1
        %v1504 = vadd.f32 %v1502, %v1503
        %v1505 = vsel %vm335, %v637, 0.0
        %v1506 = vsel %vm335, %v638, 0.0
        %v1507 = vadd.f32 %v1505, %v1506
        %v1508 = vrot.slane %v1507, 4
        %v1509 = vadd.f32 %v1507, %v1508
        %v1510 = vrot.slane %v1509, 2
        %v1511 = vadd.f32 %v1509, %v1510
        %v1512 = vrot.slane %v1511, 1
        %v1513 = vadd.f32 %v1511, %v1512
        %v1514 = vsel %vm335, %v639, 0.0
        %v1515 = vsel %vm335, %v640, 0.0
        %v1516 = vadd.f32 %v1514, %v1515
        %v1517 = vrot.slane %v1516, 4
        %v1518 = vadd.f32 %v1516, %v1517
        %v1519 = vrot.slane %v1518, 2
        %v1520 = vadd.f32 %v1518, %v1519
        %v1521 = vrot.slane %v1520, 1
        %v1522 = vadd.f32 %v1520, %v1521
        %v1523 = vsel %vm335, %v641, 0.0
        %v1524 = vsel %vm335, %v642, 0.0
        %v1525 = vadd.f32 %v1523, %v1524
        %v1526 = vrot.slane %v1525, 4
        %v1527 = vadd.f32 %v1525, %v1526
        %v1528 = vrot.slane %v1527, 2
        %v1529 = vadd.f32 %v1527, %v1528
        %v1530 = vrot.slane %v1529, 1
        %v1531 = vadd.f32 %v1529, %v1530
        %v1532 = vsel %vm335, %v643, 0.0
        %v1533 = vsel %vm335, %v644, 0.0
        %v1534 = vadd.f32 %v1532, %v1533
        %v1535 = vrot.slane %v1534, 4
        %v1536 = vadd.f32 %v1534, %v1535
        %v1537 = vrot.slane %v1536, 2
        %v1538 = vadd.f32 %v1536, %v1537
        %v1539 = vrot.slane %v1538, 1
        %v1540 = vadd.f32 %v1538, %v1539
        %v1541 = vsel %vm335, %v645, 0.0
        %v1542 = vsel %vm335, %v646, 0.0
        %v1543 = vadd.f32 %v1541, %v1542
        %v1544 = vrot.slane %v1543, 4
        %v1545 = vadd.f32 %v1543, %v1544
        %v1546 = vrot.slane %v1545, 2
        %v1547 = vadd.f32 %v1545, %v1546
        %v1548 = vrot.slane %v1547, 1
        %v1549 = vadd.f32 %v1547, %v1548
        %v1550 = vsel %vm335, %v647, 0.0
        %v1551 = vsel %vm335, %v648, 0.0
        %v1552 = vadd.f32 %v1550, %v1551
        %v1553 = vrot.slane %v1552, 4
        %v1554 = vadd.f32 %v1552, %v1553
        %v1555 = vrot.slane %v1554, 2
        %v1556 = vadd.f32 %v1554, %v1555
        %v1557 = vrot.slane %v1556, 1
        %v1558 = vadd.f32 %v1556, %v1557
        %v1559 = vmul.f32 %v633, %v633
        %v1560 = vmul.f32 %v634, %v634
        %v1561 = vmul.f32 %v635, %v635
        %v1562 = vmul.f32 %v636, %v636
        %v1563 = vmul.f32 %v637, %v637
        %v1564 = vmul.f32 %v638, %v638
        %v1565 = vmul.f32 %v639, %v639
        %v1566 = vmul.f32 %v640, %v640
        %v1567 = vmul.f32 %v641, %v641
        %v1568 = vmul.f32 %v642, %v642
        %v1569 = vmul.f32 %v643, %v643
        %v1570 = vmul.f32 %v644, %v644
        %v1571 = vmul.f32 %v645, %v645
        %v1572 = vmul.f32 %v646, %v646
        %v1573 = vmul.f32 %v647, %v647
        %v1574 = vmul.f32 %v648, %v648
        %v1575 = vsel %vm335, %v1559, 0.0
        %v1576 = vsel %vm335, %v1560, 0.0
        %v1577 = vadd.f32 %v1575, %v1576
        %v1578 = vrot.slane %v1577, 4
        %v1579 = vadd.f32 %v1577, %v1578
        %v1580 = vrot.slane %v1579, 2
        %v1581 = vadd.f32 %v1579, %v1580
        %v1582 = vrot.slane %v1581, 1
        %v1583 = vadd.f32 %v1581, %v1582
        %v1584 = vsel %vm335, %v1561, 0.0
        %v1585 = vsel %vm335, %v1562, 0.0
        %v1586 = vadd.f32 %v1584, %v1585
        %v1587 = vrot.slane %v1586, 4
        %v1588 = vadd.f32 %v1586, %v1587
        %v1589 = vrot.slane %v1588, 2
        %v1590 = vadd.f32 %v1588, %v1589
        %v1591 = vrot.slane %v1590, 1
        %v1592 = vadd.f32 %v1590, %v1591
        %v1593 = vsel %vm335, %v1563, 0.0
        %v1594 = vsel %vm335, %v1564, 0.0
        %v1595 = vadd.f32 %v1593, %v1594
        %v1596 = vrot.slane %v1595, 4
        %v1597 = vadd.f32 %v1595, %v1596
        %v1598 = vrot.slane %v1597, 2
        %v1599 = vadd.f32 %v1597, %v1598
        %v1600 = vrot.slane %v1599, 1
        %v1601 = vadd.f32 %v1599, %v1600
        %v1602 = vsel %vm335, %v1565, 0.0
        %v1603 = vsel %vm335, %v1566, 0.0
        %v1604 = vadd.f32 %v1602, %v1603
        %v1605 = vrot.slane %v1604, 4
        %v1606 = vadd.f32 %v1604, %v1605
        %v1607 = vrot.slane %v1606, 2
        %v1608 = vadd.f32 %v1606, %v1607
        %v1609 = vrot.slane %v1608, 1
        %v1610 = vadd.f32 %v1608, %v1609
        %v1611 = vsel %vm335, %v1567, 0.0
        %v1612 = vsel %vm335, %v1568, 0.0
        %v1613 = vadd.f32 %v1611, %v1612
        %v1614 = vrot.slane %v1613, 4
        %v1615 = vadd.f32 %v1613, %v1614
        %v1616 = vrot.slane %v1615, 2
        %v1617 = vadd.f32 %v1615, %v1616
        %v1618 = vrot.slane %v1617, 1
        %v1619 = vadd.f32 %v1617, %v1618
        %v1620 = vsel %vm335, %v1569, 0.0
        %v1621 = vsel %vm335, %v1570, 0.0
        %v1622 = vadd.f32 %v1620, %v1621
        %v1623 = vrot.slane %v1622, 4
        %v1624 = vadd.f32 %v1622, %v1623
        %v1625 = vrot.slane %v1624, 2
        %v1626 = vadd.f32 %v1624, %v1625
        %v1627 = vrot.slane %v1626, 1
        %v1628 = vadd.f32 %v1626, %v1627
        %v1629 = vsel %vm335, %v1571, 0.0
        %v1630 = vsel %vm335, %v1572, 0.0
        %v1631 = vadd.f32 %v1629, %v1630
        %v1632 = vrot.slane %v1631, 4
        %v1633 = vadd.f32 %v1631, %v1632
        %v1634 = vrot.slane %v1633, 2
        %v1635 = vadd.f32 %v1633, %v1634
        %v1636 = vrot.slane %v1635, 1
        %v1637 = vadd.f32 %v1635, %v1636
        %v1638 = vsel %vm335, %v1573, 0.0
        %v1639 = vsel %vm335, %v1574, 0.0
        %v1640 = vadd.f32 %v1638, %v1639
        %v1641 = vrot.slane %v1640, 4
        %v1642 = vadd.f32 %v1640, %v1641
        %v1643 = vrot.slane %v1642, 2
        %v1644 = vadd.f32 %v1642, %v1643
        %v1645 = vrot.slane %v1644, 1
        %v1646 = vadd.f32 %v1644, %v1645
        %v1647 = vmul.f32 %v1495, 0.0625
        %v1648 = vmul.f32 %v1504, 0.0625
        %v1649 = vmul.f32 %v1513, 0.0625
        %v1650 = vmul.f32 %v1522, 0.0625
        %v1651 = vmul.f32 %v1531, 0.0625
        %v1652 = vmul.f32 %v1540, 0.0625
        %v1653 = vmul.f32 %v1549, 0.0625
        %v1654 = vmul.f32 %v1558, 0.0625
        %v1655 = vmul.f32 %v1583, 0.0625
        %v1656 = vmul.f32 %v1592, 0.0625
        %v1657 = vmul.f32 %v1601, 0.0625
        %v1658 = vmul.f32 %v1610, 0.0625
        %v1659 = vmul.f32 %v1619, 0.0625
        %v1660 = vmul.f32 %v1628, 0.0625
        %v1661 = vmul.f32 %v1637, 0.0625
        %v1662 = vmul.f32 %v1646, 0.0625
        %v1663 = vmul.f32 %v1647, %v1647
        %v1664 = vmul.f32 %v1648, %v1648
        %v1665 = vmul.f32 %v1649, %v1649
        %v1666 = vmul.f32 %v1650, %v1650
        %v1667 = vmul.f32 %v1651, %v1651
        %v1668 = vmul.f32 %v1652, %v1652
        %v1669 = vmul.f32 %v1653, %v1653
        %v1670 = vmul.f32 %v1654, %v1654
        %v1671 = vsub.f32 %v1655, %v1663
        %v1672 = vsub.f32 %v1656, %v1664
        %v1673 = vsub.f32 %v1657, %v1665
        %v1674 = vsub.f32 %v1658, %v1666
        %v1675 = vsub.f32 %v1659, %v1667
        %v1676 = vsub.f32 %v1660, %v1668
        %v1677 = vsub.f32 %v1661, %v1669
        %v1678 = vsub.f32 %v1662, %v1670
        %v1679 = vmax.f32 %v1671, 0.0
        %v1680 = vmax.f32 %v1672, 0.0
        %v1681 = vmax.f32 %v1673, 0.0
        %v1682 = vmax.f32 %v1674, 0.0
        %v1683 = vmax.f32 %v1675, 0.0
        %v1684 = vmax.f32 %v1676, 0.0
        %v1685 = vmax.f32 %v1677, 0.0
        %v1686 = vmax.f32 %v1678, 0.0
        %v1687 = vsub.f32 %v633, %v1647
        %v1688 = vsub.f32 %v634, %v1647
        %v1689 = vsub.f32 %v635, %v1648
        %v1690 = vsub.f32 %v636, %v1648
        %v1691 = vsub.f32 %v637, %v1649
        %v1692 = vsub.f32 %v638, %v1649
        %v1693 = vsub.f32 %v639, %v1650
        %v1694 = vsub.f32 %v640, %v1650
        %v1695 = vsub.f32 %v641, %v1651
        %v1696 = vsub.f32 %v642, %v1651
        %v1697 = vsub.f32 %v643, %v1652
        %v1698 = vsub.f32 %v644, %v1652
        %v1699 = vsub.f32 %v645, %v1653
        %v1700 = vsub.f32 %v646, %v1653
        %v1701 = vsub.f32 %v647, %v1654
        %v1702 = vsub.f32 %v648, %v1654
        %v1703 = vadd.f32 %v1679, 1e-05
        %v1704 = vadd.f32 %v1680, 1e-05
        %v1705 = vadd.f32 %v1681, 1e-05
        %v1706 = vadd.f32 %v1682, 1e-05
        %v1707 = vadd.f32 %v1683, 1e-05
        %v1708 = vadd.f32 %v1684, 1e-05
        %v1709 = vadd.f32 %v1685, 1e-05
        %v1710 = vadd.f32 %v1686, 1e-05
        %v1711 = vrsqrt.pop %v1703
        %v1712 = vrsqrt.pop %v1704
        %v1713 = vrsqrt.pop %v1705
        %v1714 = vrsqrt.pop %v1706
        %v1715 = vrsqrt.pop %v1707
        %v1716 = vrsqrt.pop %v1708
        %v1717 = vrsqrt.pop %v1709
        %v1718 = vrsqrt.pop %v1710
        %v1719 = vmul.f32 %v1687, %v1711
        %v1720 = vmul.f32 %v1688, %v1711
        %v1721 = vmul.f32 %v1689, %v1712
        %v1722 = vmul.f32 %v1690, %v1712
        %v1723 = vmul.f32 %v1691, %v1713
        %v1724 = vmul.f32 %v1692, %v1713
        %v1725 = vmul.f32 %v1693, %v1714
        %v1726 = vmul.f32 %v1694, %v1714
        %v1727 = vmul.f32 %v1695, %v1715
        %v1728 = vmul.f32 %v1696, %v1715
        %v1729 = vmul.f32 %v1697, %v1716
        %v1730 = vmul.f32 %v1698, %v1716
        %v1731 = vmul.f32 %v1699, %v1717
        %v1732 = vmul.f32 %v1700, %v1717
        %v1733 = vmul.f32 %v1701, %v1718
        %v1734 = vmul.f32 %v1702, %v1718
        %v1735 = vpack.c.bf16 %v1720, %v1719
        %v1736 = vpack.c.bf16 %v1722, %v1721
        %v1737 = vpack.c.bf16 %v1724, %v1723
        %v1738 = vpack.c.bf16 %v1726, %v1725
        %v1739 = vpack.c.bf16 %v1728, %v1727
        %v1740 = vpack.c.bf16 %v1730, %v1729
        %v1741 = vpack.c.bf16 %v1732, %v1731
        %v1742 = vpack.c.bf16 %v1734, %v1733
        %v1743 = vsel %vm335, %v924, 0.0
        %v1744 = vsel %vm335, %v925, 0.0
        %v1745 = vadd.f32 %v1743, %v1744
        %v1746 = vrot.slane %v1745, 4
        %v1747 = vadd.f32 %v1745, %v1746
        %v1748 = vrot.slane %v1747, 2
        %v1749 = vadd.f32 %v1747, %v1748
        %v1750 = vrot.slane %v1749, 1
        %v1751 = vadd.f32 %v1749, %v1750
        %v1752 = vsel %vm335, %v926, 0.0
        %v1753 = vsel %vm335, %v927, 0.0
        %v1754 = vadd.f32 %v1752, %v1753
        %v1755 = vrot.slane %v1754, 4
        %v1756 = vadd.f32 %v1754, %v1755
        %v1757 = vrot.slane %v1756, 2
        %v1758 = vadd.f32 %v1756, %v1757
        %v1759 = vrot.slane %v1758, 1
        %v1760 = vadd.f32 %v1758, %v1759
        %v1761 = vsel %vm335, %v928, 0.0
        %v1762 = vsel %vm335, %v929, 0.0
        %v1763 = vadd.f32 %v1761, %v1762
        %v1764 = vrot.slane %v1763, 4
        %v1765 = vadd.f32 %v1763, %v1764
        %v1766 = vrot.slane %v1765, 2
        %v1767 = vadd.f32 %v1765, %v1766
        %v1768 = vrot.slane %v1767, 1
        %v1769 = vadd.f32 %v1767, %v1768
        %v1770 = vsel %vm335, %v930, 0.0
        %v1771 = vsel %vm335, %v931, 0.0
        %v1772 = vadd.f32 %v1770, %v1771
        %v1773 = vrot.slane %v1772, 4
        %v1774 = vadd.f32 %v1772, %v1773
        %v1775 = vrot.slane %v1774, 2
        %v1776 = vadd.f32 %v1774, %v1775
        %v1777 = vrot.slane %v1776, 1
        %v1778 = vadd.f32 %v1776, %v1777
        %v1779 = vsel %vm335, %v932, 0.0
        %v1780 = vsel %vm335, %v933, 0.0
        %v1781 = vadd.f32 %v1779, %v1780
        %v1782 = vrot.slane %v1781, 4
        %v1783 = vadd.f32 %v1781, %v1782
        %v1784 = vrot.slane %v1783, 2
        %v1785 = vadd.f32 %v1783, %v1784
        %v1786 = vrot.slane %v1785, 1
        %v1787 = vadd.f32 %v1785, %v1786
        %v1788 = vsel %vm335, %v934, 0.0
        %v1789 = vsel %vm335, %v935, 0.0
        %v1790 = vadd.f32 %v1788, %v1789
        %v1791 = vrot.slane %v1790, 4
        %v1792 = vadd.f32 %v1790, %v1791
        %v1793 = vrot.slane %v1792, 2
        %v1794 = vadd.f32 %v1792, %v1793
        %v1795 = vrot.slane %v1794, 1
        %v1796 = vadd.f32 %v1794, %v1795
        %v1797 = vsel %vm335, %v936, 0.0
        %v1798 = vsel %vm335, %v937, 0.0
        %v1799 = vadd.f32 %v1797, %v1798
        %v1800 = vrot.slane %v1799, 4
        %v1801 = vadd.f32 %v1799, %v1800
        %v1802 = vrot.slane %v1801, 2
        %v1803 = vadd.f32 %v1801, %v1802
        %v1804 = vrot.slane %v1803, 1
        %v1805 = vadd.f32 %v1803, %v1804
        %v1806 = vsel %vm335, %v938, 0.0
        %v1807 = vsel %vm335, %v939, 0.0
        %v1808 = vadd.f32 %v1806, %v1807
        %v1809 = vrot.slane %v1808, 4
        %v1810 = vadd.f32 %v1808, %v1809
        %v1811 = vrot.slane %v1810, 2
        %v1812 = vadd.f32 %v1810, %v1811
        %v1813 = vrot.slane %v1812, 1
        %v1814 = vadd.f32 %v1812, %v1813
        %v1815 = vmul.f32 %v924, %v924
        %v1816 = vmul.f32 %v925, %v925
        %v1817 = vmul.f32 %v926, %v926
        %v1818 = vmul.f32 %v927, %v927
        %v1819 = vmul.f32 %v928, %v928
        %v1820 = vmul.f32 %v929, %v929
        %v1821 = vmul.f32 %v930, %v930
        %v1822 = vmul.f32 %v931, %v931
        %v1823 = vmul.f32 %v932, %v932
        %v1824 = vmul.f32 %v933, %v933
        %v1825 = vmul.f32 %v934, %v934
        %v1826 = vmul.f32 %v935, %v935
        %v1827 = vmul.f32 %v936, %v936
        %v1828 = vmul.f32 %v937, %v937
        %v1829 = vmul.f32 %v938, %v938
        %v1830 = vmul.f32 %v939, %v939
        %v1831 = vsel %vm335, %v1815, 0.0
        %v1832 = vsel %vm335, %v1816, 0.0
        %v1833 = vadd.f32 %v1831, %v1832
        %v1834 = vrot.slane %v1833, 4
        %v1835 = vadd.f32 %v1833, %v1834
        %v1836 = vrot.slane %v1835, 2
        %v1837 = vadd.f32 %v1835, %v1836
        %v1838 = vrot.slane %v1837, 1
        %v1839 = vadd.f32 %v1837, %v1838
        %v1840 = vsel %vm335, %v1817, 0.0
        %v1841 = vsel %vm335, %v1818, 0.0
        %v1842 = vadd.f32 %v1840, %v1841
        %v1843 = vrot.slane %v1842, 4
        %v1844 = vadd.f32 %v1842, %v1843
        %v1845 = vrot.slane %v1844, 2
        %v1846 = vadd.f32 %v1844, %v1845
        %v1847 = vrot.slane %v1846, 1
        %v1848 = vadd.f32 %v1846, %v1847
        %v1849 = vsel %vm335, %v1819, 0.0
        %v1850 = vsel %vm335, %v1820, 0.0
        %v1851 = vadd.f32 %v1849, %v1850
        %v1852 = vrot.slane %v1851, 4
        %v1853 = vadd.f32 %v1851, %v1852
        %v1854 = vrot.slane %v1853, 2
        %v1855 = vadd.f32 %v1853, %v1854
        %v1856 = vrot.slane %v1855, 1
        %v1857 = vadd.f32 %v1855, %v1856
        %v1858 = vsel %vm335, %v1821, 0.0
        %v1859 = vsel %vm335, %v1822, 0.0
        %v1860 = vadd.f32 %v1858, %v1859
        %v1861 = vrot.slane %v1860, 4
        %v1862 = vadd.f32 %v1860, %v1861
        %v1863 = vrot.slane %v1862, 2
        %v1864 = vadd.f32 %v1862, %v1863
        %v1865 = vrot.slane %v1864, 1
        %v1866 = vadd.f32 %v1864, %v1865
        %v1867 = vsel %vm335, %v1823, 0.0
        %v1868 = vsel %vm335, %v1824, 0.0
        %v1869 = vadd.f32 %v1867, %v1868
        %v1870 = vrot.slane %v1869, 4
        %v1871 = vadd.f32 %v1869, %v1870
        %v1872 = vrot.slane %v1871, 2
        %v1873 = vadd.f32 %v1871, %v1872
        %v1874 = vrot.slane %v1873, 1
        %v1875 = vadd.f32 %v1873, %v1874
        %v1876 = vsel %vm335, %v1825, 0.0
        %v1877 = vsel %vm335, %v1826, 0.0
        %v1878 = vadd.f32 %v1876, %v1877
        %v1879 = vrot.slane %v1878, 4
        %v1880 = vadd.f32 %v1878, %v1879
        %v1881 = vrot.slane %v1880, 2
        %v1882 = vadd.f32 %v1880, %v1881
        %v1883 = vrot.slane %v1882, 1
        %v1884 = vadd.f32 %v1882, %v1883
        %v1885 = vsel %vm335, %v1827, 0.0
        %v1886 = vsel %vm335, %v1828, 0.0
        %v1887 = vadd.f32 %v1885, %v1886
        %v1888 = vrot.slane %v1887, 4
        %v1889 = vadd.f32 %v1887, %v1888
        %v1890 = vrot.slane %v1889, 2
        %v1891 = vadd.f32 %v1889, %v1890
        %v1892 = vrot.slane %v1891, 1
        %v1893 = vadd.f32 %v1891, %v1892
        %v1894 = vsel %vm335, %v1829, 0.0
        %v1895 = vsel %vm335, %v1830, 0.0
        %v1896 = vadd.f32 %v1894, %v1895
        %v1897 = vrot.slane %v1896, 4
        %v1898 = vadd.f32 %v1896, %v1897
        %v1899 = vrot.slane %v1898, 2
        %v1900 = vadd.f32 %v1898, %v1899
        %v1901 = vrot.slane %v1900, 1
        %v1902 = vadd.f32 %v1900, %v1901
        %v1903 = vmul.f32 %v1751, 0.0625
        %v1904 = vmul.f32 %v1760, 0.0625
        %v1905 = vmul.f32 %v1769, 0.0625
        %v1906 = vmul.f32 %v1778, 0.0625
        %v1907 = vmul.f32 %v1787, 0.0625
        %v1908 = vmul.f32 %v1796, 0.0625
        %v1909 = vmul.f32 %v1805, 0.0625
        %v1910 = vmul.f32 %v1814, 0.0625
        %v1911 = vmul.f32 %v1839, 0.0625
        %v1912 = vmul.f32 %v1848, 0.0625
        %v1913 = vmul.f32 %v1857, 0.0625
        %v1914 = vmul.f32 %v1866, 0.0625
        %v1915 = vmul.f32 %v1875, 0.0625
        %v1916 = vmul.f32 %v1884, 0.0625
        %v1917 = vmul.f32 %v1893, 0.0625
        %v1918 = vmul.f32 %v1902, 0.0625
        %v1919 = vmul.f32 %v1903, %v1903
        %v1920 = vmul.f32 %v1904, %v1904
        %v1921 = vmul.f32 %v1905, %v1905
        %v1922 = vmul.f32 %v1906, %v1906
        %v1923 = vmul.f32 %v1907, %v1907
        %v1924 = vmul.f32 %v1908, %v1908
        %v1925 = vmul.f32 %v1909, %v1909
        %v1926 = vmul.f32 %v1910, %v1910
        %v1927 = vsub.f32 %v1911, %v1919
        %v1928 = vsub.f32 %v1912, %v1920
        %v1929 = vsub.f32 %v1913, %v1921
        %v1930 = vsub.f32 %v1914, %v1922
        %v1931 = vsub.f32 %v1915, %v1923
        %v1932 = vsub.f32 %v1916, %v1924
        %v1933 = vsub.f32 %v1917, %v1925
        %v1934 = vsub.f32 %v1918, %v1926
        %v1935 = vmax.f32 %v1927, 0.0
        %v1936 = vmax.f32 %v1928, 0.0
        %v1937 = vmax.f32 %v1929, 0.0
        %v1938 = vmax.f32 %v1930, 0.0
        %v1939 = vmax.f32 %v1931, 0.0
        %v1940 = vmax.f32 %v1932, 0.0
        %v1941 = vmax.f32 %v1933, 0.0
        %v1942 = vmax.f32 %v1934, 0.0
        %v1943 = vsub.f32 %v924, %v1903
        %v1944 = vsub.f32 %v925, %v1903
        %v1945 = vsub.f32 %v926, %v1904
        %v1946 = vsub.f32 %v927, %v1904
        %v1947 = vsub.f32 %v928, %v1905
        %v1948 = vsub.f32 %v929, %v1905
        %v1949 = vsub.f32 %v930, %v1906
        %v1950 = vsub.f32 %v931, %v1906
        %v1951 = vsub.f32 %v932, %v1907
        %v1952 = vsub.f32 %v933, %v1907
        %v1953 = vsub.f32 %v934, %v1908
        %v1954 = vsub.f32 %v935, %v1908
        %v1955 = vsub.f32 %v936, %v1909
        %v1956 = vsub.f32 %v937, %v1909
        %v1957 = vsub.f32 %v938, %v1910
        %v1958 = vsub.f32 %v939, %v1910
        %v1959 = vadd.f32 %v1935, 1e-05
        %v1960 = vadd.f32 %v1936, 1e-05
        %v1961 = vadd.f32 %v1937, 1e-05
        %v1962 = vadd.f32 %v1938, 1e-05
        %v1963 = vadd.f32 %v1939, 1e-05
        %v1964 = vadd.f32 %v1940, 1e-05
        %v1965 = vadd.f32 %v1941, 1e-05
        %v1966 = vadd.f32 %v1942, 1e-05
        %v1967 = vrsqrt.pop %v1959
        %v1968 = vrsqrt.pop %v1960
        %v1969 = vrsqrt.pop %v1961
        %v1970 = vrsqrt.pop %v1962
        %v1971 = vrsqrt.pop %v1963
        %v1972 = vrsqrt.pop %v1964
        %v1973 = vrsqrt.pop %v1965
        %v1974 = vrsqrt.pop %v1966
        %v1975 = vmul.f32 %v1943, %v1967
        %v1976 = vmul.f32 %v1944, %v1967
        %v1977 = vmul.f32 %v1945, %v1968
        %v1978 = vmul.f32 %v1946, %v1968
        %v1979 = vmul.f32 %v1947, %v1969
        %v1980 = vmul.f32 %v1948, %v1969
        %v1981 = vmul.f32 %v1949, %v1970
        %v1982 = vmul.f32 %v1950, %v1970
        %v1983 = vmul.f32 %v1951, %v1971
        %v1984 = vmul.f32 %v1952, %v1971
        %v1985 = vmul.f32 %v1953, %v1972
        %v1986 = vmul.f32 %v1954, %v1972
        %v1987 = vmul.f32 %v1955, %v1973
        %v1988 = vmul.f32 %v1956, %v1973
        %v1989 = vmul.f32 %v1957, %v1974
        %v1990 = vmul.f32 %v1958, %v1974
        %v1991 = vpack.c.bf16 %v1976, %v1975
        %v1992 = vpack.c.bf16 %v1978, %v1977
        %v1993 = vpack.c.bf16 %v1980, %v1979
        %v1994 = vpack.c.bf16 %v1982, %v1981
        %v1995 = vpack.c.bf16 %v1984, %v1983
        %v1996 = vpack.c.bf16 %v1986, %v1985
        %v1997 = vpack.c.bf16 %v1988, %v1987
        %v1998 = vpack.c.bf16 %v1990, %v1989
        %v1999 = vsel %vm335, %v1215, 0.0
        %v2000 = vsel %vm335, %v1216, 0.0
        %v2001 = vadd.f32 %v1999, %v2000
        %v2002 = vrot.slane %v2001, 4
        %v2003 = vadd.f32 %v2001, %v2002
        %v2004 = vrot.slane %v2003, 2
        %v2005 = vadd.f32 %v2003, %v2004
        %v2006 = vrot.slane %v2005, 1
        %v2007 = vadd.f32 %v2005, %v2006
        %v2008 = vsel %vm335, %v1217, 0.0
        %v2009 = vsel %vm335, %v1218, 0.0
        %v2010 = vadd.f32 %v2008, %v2009
        %v2011 = vrot.slane %v2010, 4
        %v2012 = vadd.f32 %v2010, %v2011
        %v2013 = vrot.slane %v2012, 2
        %v2014 = vadd.f32 %v2012, %v2013
        %v2015 = vrot.slane %v2014, 1
        %v2016 = vadd.f32 %v2014, %v2015
        %v2017 = vsel %vm335, %v1219, 0.0
        %v2018 = vsel %vm335, %v1220, 0.0
        %v2019 = vadd.f32 %v2017, %v2018
        %v2020 = vrot.slane %v2019, 4
        %v2021 = vadd.f32 %v2019, %v2020
        %v2022 = vrot.slane %v2021, 2
        %v2023 = vadd.f32 %v2021, %v2022
        %v2024 = vrot.slane %v2023, 1
        %v2025 = vadd.f32 %v2023, %v2024
        %v2026 = vsel %vm335, %v1221, 0.0
        %v2027 = vsel %vm335, %v1222, 0.0
        %v2028 = vadd.f32 %v2026, %v2027
        %v2029 = vrot.slane %v2028, 4
        %v2030 = vadd.f32 %v2028, %v2029
        %v2031 = vrot.slane %v2030, 2
        %v2032 = vadd.f32 %v2030, %v2031
        %v2033 = vrot.slane %v2032, 1
        %v2034 = vadd.f32 %v2032, %v2033
        %v2035 = vsel %vm335, %v1223, 0.0
        %v2036 = vsel %vm335, %v1224, 0.0
        %v2037 = vadd.f32 %v2035, %v2036
        %v2038 = vrot.slane %v2037, 4
        %v2039 = vadd.f32 %v2037, %v2038
        %v2040 = vrot.slane %v2039, 2
        %v2041 = vadd.f32 %v2039, %v2040
        %v2042 = vrot.slane %v2041, 1
        %v2043 = vadd.f32 %v2041, %v2042
        %v2044 = vsel %vm335, %v1225, 0.0
        %v2045 = vsel %vm335, %v1226, 0.0
        %v2046 = vadd.f32 %v2044, %v2045
        %v2047 = vrot.slane %v2046, 4
        %v2048 = vadd.f32 %v2046, %v2047
        %v2049 = vrot.slane %v2048, 2
        %v2050 = vadd.f32 %v2048, %v2049
        %v2051 = vrot.slane %v2050, 1
        %v2052 = vadd.f32 %v2050, %v2051
        %v2053 = vsel %vm335, %v1227, 0.0
        %v2054 = vsel %vm335, %v1228, 0.0
        %v2055 = vadd.f32 %v2053, %v2054
        %v2056 = vrot.slane %v2055, 4
        %v2057 = vadd.f32 %v2055, %v2056
        %v2058 = vrot.slane %v2057, 2
        %v2059 = vadd.f32 %v2057, %v2058
        %v2060 = vrot.slane %v2059, 1
        %v2061 = vadd.f32 %v2059, %v2060
        %v2062 = vsel %vm335, %v1229, 0.0
        %v2063 = vsel %vm335, %v1230, 0.0
        %v2064 = vadd.f32 %v2062, %v2063
        %v2065 = vrot.slane %v2064, 4
        %v2066 = vadd.f32 %v2064, %v2065
        %v2067 = vrot.slane %v2066, 2
        %v2068 = vadd.f32 %v2066, %v2067
        %v2069 = vrot.slane %v2068, 1
        %v2070 = vadd.f32 %v2068, %v2069
        %v2071 = vmul.f32 %v1215, %v1215
        %v2072 = vmul.f32 %v1216, %v1216
        %v2073 = vmul.f32 %v1217, %v1217
        %v2074 = vmul.f32 %v1218, %v1218
        %v2075 = vmul.f32 %v1219, %v1219
        %v2076 = vmul.f32 %v1220, %v1220
        %v2077 = vmul.f32 %v1221, %v1221
        %v2078 = vmul.f32 %v1222, %v1222
        %v2079 = vmul.f32 %v1223, %v1223
        %v2080 = vmul.f32 %v1224, %v1224
        %v2081 = vmul.f32 %v1225, %v1225
        %v2082 = vmul.f32 %v1226, %v1226
        %v2083 = vmul.f32 %v1227, %v1227
        %v2084 = vmul.f32 %v1228, %v1228
        %v2085 = vmul.f32 %v1229, %v1229
        %v2086 = vmul.f32 %v1230, %v1230
        %v2087 = vsel %vm335, %v2071, 0.0
        %v2088 = vsel %vm335, %v2072, 0.0
        %v2089 = vadd.f32 %v2087, %v2088
        %v2090 = vrot.slane %v2089, 4
        %v2091 = vadd.f32 %v2089, %v2090
        %v2092 = vrot.slane %v2091, 2
        %v2093 = vadd.f32 %v2091, %v2092
        %v2094 = vrot.slane %v2093, 1
        %v2095 = vadd.f32 %v2093, %v2094
        %v2096 = vsel %vm335, %v2073, 0.0
        %v2097 = vsel %vm335, %v2074, 0.0
        %v2098 = vadd.f32 %v2096, %v2097
        %v2099 = vrot.slane %v2098, 4
        %v2100 = vadd.f32 %v2098, %v2099
        %v2101 = vrot.slane %v2100, 2
        %v2102 = vadd.f32 %v2100, %v2101
        %v2103 = vrot.slane %v2102, 1
        %v2104 = vadd.f32 %v2102, %v2103
        %v2105 = vsel %vm335, %v2075, 0.0
        %v2106 = vsel %vm335, %v2076, 0.0
        %v2107 = vadd.f32 %v2105, %v2106
        %v2108 = vrot.slane %v2107, 4
        %v2109 = vadd.f32 %v2107, %v2108
        %v2110 = vrot.slane %v2109, 2
        %v2111 = vadd.f32 %v2109, %v2110
        %v2112 = vrot.slane %v2111, 1
        %v2113 = vadd.f32 %v2111, %v2112
        %v2114 = vsel %vm335, %v2077, 0.0
        %v2115 = vsel %vm335, %v2078, 0.0
        %v2116 = vadd.f32 %v2114, %v2115
        %v2117 = vrot.slane %v2116, 4
        %v2118 = vadd.f32 %v2116, %v2117
        %v2119 = vrot.slane %v2118, 2
        %v2120 = vadd.f32 %v2118, %v2119
        %v2121 = vrot.slane %v2120, 1
        %v2122 = vadd.f32 %v2120, %v2121
        %v2123 = vsel %vm335, %v2079, 0.0
        %v2124 = vsel %vm335, %v2080, 0.0
        %v2125 = vadd.f32 %v2123, %v2124
        %v2126 = vrot.slane %v2125, 4
        %v2127 = vadd.f32 %v2125, %v2126
        %v2128 = vrot.slane %v2127, 2
        %v2129 = vadd.f32 %v2127, %v2128
        %v2130 = vrot.slane %v2129, 1
        %v2131 = vadd.f32 %v2129, %v2130
        %v2132 = vsel %vm335, %v2081, 0.0
        %v2133 = vsel %vm335, %v2082, 0.0
        %v2134 = vadd.f32 %v2132, %v2133
        %v2135 = vrot.slane %v2134, 4
        %v2136 = vadd.f32 %v2134, %v2135
        %v2137 = vrot.slane %v2136, 2
        %v2138 = vadd.f32 %v2136, %v2137
        %v2139 = vrot.slane %v2138, 1
        %v2140 = vadd.f32 %v2138, %v2139
        %v2141 = vsel %vm335, %v2083, 0.0
        %v2142 = vsel %vm335, %v2084, 0.0
        %v2143 = vadd.f32 %v2141, %v2142
        %v2144 = vrot.slane %v2143, 4
        %v2145 = vadd.f32 %v2143, %v2144
        %v2146 = vrot.slane %v2145, 2
        %v2147 = vadd.f32 %v2145, %v2146
        %v2148 = vrot.slane %v2147, 1
        %v2149 = vadd.f32 %v2147, %v2148
        %v2150 = vsel %vm335, %v2085, 0.0
        %v2151 = vsel %vm335, %v2086, 0.0
        %v2152 = vadd.f32 %v2150, %v2151
        %v2153 = vrot.slane %v2152, 4
        %v2154 = vadd.f32 %v2152, %v2153
        %v2155 = vrot.slane %v2154, 2
        %v2156 = vadd.f32 %v2154, %v2155
        %v2157 = vrot.slane %v2156, 1
        %v2158 = vadd.f32 %v2156, %v2157
        %v2159 = vmul.f32 %v2007, 0.0625
        %v2160 = vmul.f32 %v2016, 0.0625
        %v2161 = vmul.f32 %v2025, 0.0625
        %v2162 = vmul.f32 %v2034, 0.0625
        %v2163 = vmul.f32 %v2043, 0.0625
        %v2164 = vmul.f32 %v2052, 0.0625
        %v2165 = vmul.f32 %v2061, 0.0625
        %v2166 = vmul.f32 %v2070, 0.0625
        %v2167 = vmul.f32 %v2095, 0.0625
        %v2168 = vmul.f32 %v2104, 0.0625
        %v2169 = vmul.f32 %v2113, 0.0625
        %v2170 = vmul.f32 %v2122, 0.0625
        %v2171 = vmul.f32 %v2131, 0.0625
        %v2172 = vmul.f32 %v2140, 0.0625
        %v2173 = vmul.f32 %v2149, 0.0625
        %v2174 = vmul.f32 %v2158, 0.0625
        %v2175 = vmul.f32 %v2159, %v2159
        %v2176 = vmul.f32 %v2160, %v2160
        %v2177 = vmul.f32 %v2161, %v2161
        %v2178 = vmul.f32 %v2162, %v2162
        %v2179 = vmul.f32 %v2163, %v2163
        %v2180 = vmul.f32 %v2164, %v2164
        %v2181 = vmul.f32 %v2165, %v2165
        %v2182 = vmul.f32 %v2166, %v2166
        %v2183 = vsub.f32 %v2167, %v2175
        %v2184 = vsub.f32 %v2168, %v2176
        %v2185 = vsub.f32 %v2169, %v2177
        %v2186 = vsub.f32 %v2170, %v2178
        %v2187 = vsub.f32 %v2171, %v2179
        %v2188 = vsub.f32 %v2172, %v2180
        %v2189 = vsub.f32 %v2173, %v2181
        %v2190 = vsub.f32 %v2174, %v2182
        %v2191 = vmax.f32 %v2183, 0.0
        %v2192 = vmax.f32 %v2184, 0.0
        %v2193 = vmax.f32 %v2185, 0.0
        %v2194 = vmax.f32 %v2186, 0.0
        %v2195 = vmax.f32 %v2187, 0.0
        %v2196 = vmax.f32 %v2188, 0.0
        %v2197 = vmax.f32 %v2189, 0.0
        %v2198 = vmax.f32 %v2190, 0.0
        %v2199 = vsub.f32 %v1215, %v2159
        %v2200 = vsub.f32 %v1216, %v2159
        %v2201 = vsub.f32 %v1217, %v2160
        %v2202 = vsub.f32 %v1218, %v2160
        %v2203 = vsub.f32 %v1219, %v2161
        %v2204 = vsub.f32 %v1220, %v2161
        %v2205 = vsub.f32 %v1221, %v2162
        %v2206 = vsub.f32 %v1222, %v2162
        %v2207 = vsub.f32 %v1223, %v2163
        %v2208 = vsub.f32 %v1224, %v2163
        %v2209 = vsub.f32 %v1225, %v2164
        %v2210 = vsub.f32 %v1226, %v2164
        %v2211 = vsub.f32 %v1227, %v2165
        %v2212 = vsub.f32 %v1228, %v2165
        %v2213 = vsub.f32 %v1229, %v2166
        %v2214 = vsub.f32 %v1230, %v2166
        %v2215 = vadd.f32 %v2191, 1e-05
        %v2216 = vadd.f32 %v2192, 1e-05
        %v2217 = vadd.f32 %v2193, 1e-05
        %v2218 = vadd.f32 %v2194, 1e-05
        %v2219 = vadd.f32 %v2195, 1e-05
        %v2220 = vadd.f32 %v2196, 1e-05
        %v2221 = vadd.f32 %v2197, 1e-05
        %v2222 = vadd.f32 %v2198, 1e-05
        %v2223 = vrsqrt.pop %v2215
        %v2224 = vrsqrt.pop %v2216
        %v2225 = vrsqrt.pop %v2217
        %v2226 = vrsqrt.pop %v2218
        %v2227 = vrsqrt.pop %v2219
        %v2228 = vrsqrt.pop %v2220
        %v2229 = vrsqrt.pop %v2221
        %v2230 = vrsqrt.pop %v2222
        %v2231 = vmul.f32 %v2199, %v2223
        %v2232 = vmul.f32 %v2200, %v2223
        %v2233 = vmul.f32 %v2201, %v2224
        %v2234 = vmul.f32 %v2202, %v2224
        %v2235 = vmul.f32 %v2203, %v2225
        %v2236 = vmul.f32 %v2204, %v2225
        %v2237 = vmul.f32 %v2205, %v2226
        %v2238 = vmul.f32 %v2206, %v2226
        %v2239 = vmul.f32 %v2207, %v2227
        %v2240 = vmul.f32 %v2208, %v2227
        %v2241 = vmul.f32 %v2209, %v2228
        %v2242 = vmul.f32 %v2210, %v2228
        %v2243 = vmul.f32 %v2211, %v2229
        %v2244 = vmul.f32 %v2212, %v2229
        %v2245 = vmul.f32 %v2213, %v2230
        %v2246 = vmul.f32 %v2214, %v2230
        %v2247 = vpack.c.bf16 %v2232, %v2231
        %v2248 = vpack.c.bf16 %v2234, %v2233
        %v2249 = vpack.c.bf16 %v2236, %v2235
        %v2250 = vpack.c.bf16 %v2238, %v2237
        %v2251 = vpack.c.bf16 %v2240, %v2239
        %v2252 = vpack.c.bf16 %v2242, %v2241
        %v2253 = vpack.c.bf16 %v2244, %v2243
        %v2254 = vpack.c.bf16 %v2246, %v2245
        %2263 = vrot.lane.b32.xlu0 %v1735, 32
        %v2264 = vpop.permute.xlu0 %2263
        %2265 = vrot.lane.b32.xlu0 %v1736, 32
        %v2266 = vpop.permute.xlu0 %2265
        %2267 = vrot.lane.b32.xlu0 %v1737, 32
        %v2268 = vpop.permute.xlu0 %2267
        %2269 = vrot.lane.b32.xlu0 %v1738, 32
        %v2270 = vpop.permute.xlu0 %2269
        %2271 = vrot.lane.b32.xlu0 %v1739, 32
        %v2272 = vpop.permute.xlu0 %2271
        %2273 = vrot.lane.b32.xlu0 %v1740, 32
        %v2274 = vpop.permute.xlu0 %2273
        %2275 = vrot.lane.b32.xlu0 %v1741, 32
        %v2276 = vpop.permute.xlu0 %2275
        %2277 = vrot.lane.b32.xlu0 %v1742, 32
        %v2278 = vpop.permute.xlu0 %2277
        %2287 = vrot.lane.b32.xlu0 %v1991, 64
        %v2288 = vpop.permute.xlu0 %2287
        %2289 = vrot.lane.b32.xlu0 %v1992, 64
        %v2290 = vpop.permute.xlu0 %2289
        %2291 = vrot.lane.b32.xlu0 %v1993, 64
        %v2292 = vpop.permute.xlu0 %2291
        %2293 = vrot.lane.b32.xlu0 %v1994, 64
        %v2294 = vpop.permute.xlu0 %2293
        %2295 = vrot.lane.b32.xlu0 %v1995, 64
        %v2296 = vpop.permute.xlu0 %2295
        %2297 = vrot.lane.b32.xlu0 %v1996, 64
        %v2298 = vpop.permute.xlu0 %2297
        %2299 = vrot.lane.b32.xlu0 %v1997, 64
        %v2300 = vpop.permute.xlu0 %2299
        %2301 = vrot.lane.b32.xlu0 %v1998, 64
        %v2302 = vpop.permute.xlu0 %2301
        %2311 = vrot.lane.b32.xlu0 %v2247, 96
        %v2312 = vpop.permute.xlu0 %2311
        %2313 = vrot.lane.b32.xlu0 %v2248, 96
        %v2314 = vpop.permute.xlu0 %2313
        %2315 = vrot.lane.b32.xlu0 %v2249, 96
        %v2316 = vpop.permute.xlu0 %2315
        %2317 = vrot.lane.b32.xlu0 %v2250, 96
        %v2318 = vpop.permute.xlu0 %2317
        %2319 = vrot.lane.b32.xlu0 %v2251, 96
        %v2320 = vpop.permute.xlu0 %2319
        %2321 = vrot.lane.b32.xlu0 %v2252, 96
        %v2322 = vpop.permute.xlu0 %2321
        %2323 = vrot.lane.b32.xlu0 %v2253, 96
        %v2324 = vpop.permute.xlu0 %2323
        %2325 = vrot.lane.b32.xlu0 %v2254, 96
        %v2326 = vpop.permute.xlu0 %2325
        %v2329 = vsel %vm335, %v1479, %v2264
        %v2332 = vsel %vm335, %v1480, %v2266
        %v2335 = vsel %vm335, %v1481, %v2268
        %v2338 = vsel %vm335, %v1482, %v2270
        %v2341 = vsel %vm335, %v1483, %v2272
        %v2344 = vsel %vm335, %v1484, %v2274
        %v2347 = vsel %vm335, %v1485, %v2276
        %v2350 = vsel %vm335, %v1486, %v2278
        %vm2351 = vcmask 523264
        %v2353 = vsel %vm2351, %v2329, %v2288
        %v2355 = vsel %vm2351, %v2332, %v2290
        %v2357 = vsel %vm2351, %v2335, %v2292
        %v2359 = vsel %vm2351, %v2338, %v2294
        %v2361 = vsel %vm2351, %v2341, %v2296
        %v2363 = vsel %vm2351, %v2344, %v2298
        %v2365 = vsel %vm2351, %v2347, %v2300
        %v2367 = vsel %vm2351, %v2350, %v2302
        %vm2368 = vcmask 785408
        %v2370 = vsel %vm2368, %v2353, %v2312
        %v2373 = vsel %vm2368, %v2355, %v2314
        %v2376 = vsel %vm2368, %v2357, %v2316
        %v2379 = vsel %vm2368, %v2359, %v2318
        %v2382 = vsel %vm2368, %v2361, %v2320
        %v2385 = vsel %vm2368, %v2363, %v2322
        %v2388 = vsel %vm2368, %v2365, %v2324
        %v2391 = vsel %vm2368, %v2367, %v2326
        %v2393 = vld [vmem:[%s4] sm:$0xf]
        %v2394 = vld [vmem:[%s4 + $0x4] sm:$0xf]
        %v2395 = vld [vmem:[%s4 + $0x8] sm:$0xf]
        %v2396 = vld [vmem:[%s4 + $0xc] sm:$0xf]
        %v2397 = vld [vmem:[%s4 + $0x10] sm:$0xf]
        %v2398 = vld [vmem:[%s4 + $0x14] sm:$0xf]
        %v2399 = vld [vmem:[%s4 + $0x18] sm:$0xf]
        %v2400 = vld [vmem:[%s4 + $0x1c] sm:$0xf]
        %v2401 = vld [vmem:[%s4 + $0x20] sm:$0xf]
        %v2402 = vld [vmem:[%s4 + $0x24] sm:$0xf]
        %v2403 = vld [vmem:[%s4 + $0x28] sm:$0xf]
        %v2404 = vld [vmem:[%s4 + $0x2c] sm:$0xf]
        %v2405 = vld [vmem:[%s4 + $0x30] sm:$0xf]
        %v2406 = vld [vmem:[%s4 + $0x34] sm:$0xf]
        %v2407 = vld [vmem:[%s4 + $0x38] sm:$0xf]
        %v2408 = vld [vmem:[%s4 + $0x3c] sm:$0xf]
        %v2409 = vld [vmem:[%s5] sm:$0x1]
        %v2411 = vlaneseq
        %v2412 = vshrl.u32 %v2411, 7
        %v2413 = vsub.s32 0, %v2412
        %v2414 = vrot.slane %v2409, %v2413
        %v2432 = vunpack.c.l.b16 %v2393
        %v2433 = vunpack.c.l.b16 %v2394
        %v2434 = vunpack.c.l.b16 %v2395
        %v2435 = vunpack.c.l.b16 %v2396
        %v2436 = vunpack.c.l.b16 %v2397
        %v2437 = vunpack.c.l.b16 %v2398
        %v2438 = vunpack.c.l.b16 %v2399
        %v2439 = vunpack.c.l.b16 %v2400
        %v2440 = vunpack.c.l.b16 %v2401
        %v2441 = vunpack.c.l.b16 %v2402
        %v2442 = vunpack.c.l.b16 %v2403
        %v2443 = vunpack.c.l.b16 %v2404
        %v2444 = vunpack.c.l.b16 %v2405
        %v2445 = vunpack.c.l.b16 %v2406
        %v2446 = vunpack.c.l.b16 %v2407
        %v2447 = vunpack.c.l.b16 %v2408
        %v2448 = vpack.c.b16 %v2433, %v2432
        %v2449 = vpack.c.b16 %v2435, %v2434
        %v2450 = vpack.c.b16 %v2437, %v2436
        %v2451 = vpack.c.b16 %v2439, %v2438
        %v2452 = vpack.c.b16 %v2441, %v2440
        %v2453 = vpack.c.b16 %v2443, %v2442
        %v2454 = vpack.c.b16 %v2445, %v2444
        %v2455 = vpack.c.b16 %v2447, %v2446
        %2464 = vmatprep.subr.bf16.mxu0 0
        %2465 = vmatpush1.bf16.msra.mxu0 %v2448
        %2466 = vmatprep.subr.bf16.mxu0 0
        %2467 = vmatpush1.bf16.msra.mxu0 %v2449
        %2468 = vmatprep.subr.bf16.mxu0 0
        %2469 = vmatpush1.bf16.msra.mxu0 %v2450
        %2470 = vmatprep.subr.bf16.mxu0 0
        %2471 = vmatpush1.bf16.msra.mxu0 %v2451
        %2472 = vmatprep.subr.bf16.mxu0 0
        %2473 = vmatpush1.bf16.msra.mxu0 %v2452
        %2474 = vmatprep.subr.bf16.mxu0 0
        %2475 = vmatpush1.bf16.msra.mxu0 %v2453
        %2476 = vmatprep.subr.bf16.mxu0 0
        %2477 = vmatpush1.bf16.msra.mxu0 %v2454
        %2478 = vmatprep.subr.bf16.mxu0 0
        %2479 = vmatpush1.bf16.msra.mxu0 %v2455
        %2480 = vmatprep.subr.bf16.mxu0 0
        %2481 = vmatpush1.bf16.msra.mxu0 0
        %2482 = vmatprep.subr.bf16.mxu0 0
        %2483 = vmatpush1.bf16.msra.mxu0 0
        %2484 = vmatprep.subr.bf16.mxu0 0
        %2485 = vmatpush1.bf16.msra.mxu0 0
        %2486 = vmatprep.subr.bf16.mxu0 0
        %2487 = vmatpush1.bf16.msra.mxu0 0
        %2488 = vmatprep.subr.bf16.mxu0 0
        %2489 = vmatpush1.bf16.msra.mxu0 0
        %2490 = vmatprep.subr.bf16.mxu0 0
        %2491 = vmatpush1.bf16.msra.mxu0 0
        %2492 = vmatprep.subr.bf16.mxu0 0
        %2493 = vmatpush1.bf16.msra.mxu0 0
        %2494 = vmatprep.subr.bf16.mxu0 0
        %2495 = vmatpush1.bf16.msra.mxu0 0
        %2496 = vmatprep.mubr.bf16.mxu0 0
        %2497 = vmatmul.mubr.bf16.gmra.mrb[0].mxu0 %v2370
        %v2498 = vpop.f32.mrb[0].mxu0
        %v2499 = vadd.f32 %v2414, %v2498
        %v2500 = vpop.f32.mrb[0].mxu0
        %v2501 = vpop.f32.mrb[0].mxu0
        %v2502 = vadd.f32 %v2414, %v2501
        %v2503 = vpop.f32.mrb[0].mxu0
        %2504 = vmatprep.mubr.bf16.mxu0 0
        %2505 = vmatmul.mubr.bf16.gmra.mrb[0].mxu0 %v2373
        %v2506 = vpop.f32.mrb[0].mxu0
        %v2507 = vadd.f32 %v2414, %v2506
        %v2508 = vpop.f32.mrb[0].mxu0
        %v2509 = vpop.f32.mrb[0].mxu0
        %v2510 = vadd.f32 %v2414, %v2509
        %v2511 = vpop.f32.mrb[0].mxu0
        %2512 = vmatprep.mubr.bf16.mxu0 0
        %2513 = vmatmul.mubr.bf16.gmra.mrb[0].mxu0 %v2376
        %v2514 = vpop.f32.mrb[0].mxu0
        %v2515 = vadd.f32 %v2414, %v2514
        %v2516 = vpop.f32.mrb[0].mxu0
        %v2517 = vpop.f32.mrb[0].mxu0
        %v2518 = vadd.f32 %v2414, %v2517
        %v2519 = vpop.f32.mrb[0].mxu0
        %2520 = vmatprep.mubr.bf16.mxu0 0
        %2521 = vmatmul.mubr.bf16.gmra.mrb[0].mxu0 %v2379
        %v2522 = vpop.f32.mrb[0].mxu0
        %v2523 = vadd.f32 %v2414, %v2522
        %v2524 = vpop.f32.mrb[0].mxu0
        %v2525 = vpop.f32.mrb[0].mxu0
        %v2526 = vadd.f32 %v2414, %v2525
        %v2527 = vpop.f32.mrb[0].mxu0
        %2528 = vmatprep.mubr.bf16.mxu0 0
        %2529 = vmatmul.mubr.bf16.gmra.mrb[0].mxu0 %v2382
        %v2530 = vpop.f32.mrb[0].mxu0
        %v2531 = vadd.f32 %v2414, %v2530
        %v2532 = vpop.f32.mrb[0].mxu0
        %v2533 = vpop.f32.mrb[0].mxu0
        %v2534 = vadd.f32 %v2414, %v2533
        %v2535 = vpop.f32.mrb[0].mxu0
        %2536 = vmatprep.mubr.bf16.mxu0 0
        %2537 = vmatmul.mubr.bf16.gmra.mrb[0].mxu0 %v2385
        %v2538 = vpop.f32.mrb[0].mxu0
        %v2539 = vadd.f32 %v2414, %v2538
        %v2540 = vpop.f32.mrb[0].mxu0
        %v2541 = vpop.f32.mrb[0].mxu0
        %v2542 = vadd.f32 %v2414, %v2541
        %v2543 = vpop.f32.mrb[0].mxu0
        %2544 = vmatprep.mubr.bf16.mxu0 0
        %2545 = vmatmul.mubr.bf16.gmra.mrb[0].mxu0 %v2388
        %v2546 = vpop.f32.mrb[0].mxu0
        %v2547 = vadd.f32 %v2414, %v2546
        %v2548 = vpop.f32.mrb[0].mxu0
        %v2549 = vpop.f32.mrb[0].mxu0
        %v2550 = vadd.f32 %v2414, %v2549
        %v2551 = vpop.f32.mrb[0].mxu0
        %2552 = vmatprep.mubr.bf16.mxu0 0
        %2553 = vmatmul.mubr.bf16.gmra.mrb[0].mxu0 %v2391
        %v2554 = vpop.f32.mrb[0].mxu0
        %v2555 = vadd.f32 %v2414, %v2554
        %v2556 = vpop.f32.mrb[0].mxu0
        %v2557 = vpop.f32.mrb[0].mxu0
        %v2558 = vadd.f32 %v2414, %v2557
        %v2559 = vpop.f32.mrb[0].mxu0
        %2560 = vdwg.mxu0
        %2561 = vst.msk [vmem:[%s263] sm:$0xff] %vm335, %v2499
        %2562 = vst.msk [vmem:[%s263 + $0x8] sm:$0xff] %vm335, %v2502
        %2563 = vst.msk [vmem:[%s263 + $0x10] sm:$0xff] %vm335, %v2507
        %2564 = vst.msk [vmem:[%s263 + $0x18] sm:$0xff] %vm335, %v2510
        %2565 = vst.msk [vmem:[%s263 + $0x20] sm:$0xff] %vm335, %v2515
        %2566 = vst.msk [vmem:[%s263 + $0x28] sm:$0xff] %vm335, %v2518
        %2567 = vst.msk [vmem:[%s263 + $0x30] sm:$0xff] %vm335, %v2523
        %2568 = vst.msk [vmem:[%s263 + $0x38] sm:$0xff] %vm335, %v2526
        %2569 = vst.msk [vmem:[%s263 + $0x40] sm:$0xff] %vm335, %v2531
        %2570 = vst.msk [vmem:[%s263 + $0x48] sm:$0xff] %vm335, %v2534
        %2571 = vst.msk [vmem:[%s263 + $0x50] sm:$0xff] %vm335, %v2539
        %2572 = vst.msk [vmem:[%s263 + $0x58] sm:$0xff] %vm335, %v2542
        %2573 = vst.msk [vmem:[%s263 + $0x60] sm:$0xff] %vm335, %v2547
        %2574 = vst.msk [vmem:[%s263 + $0x68] sm:$0xff] %vm335, %v2550
        %2575 = vst.msk [vmem:[%s263 + $0x70] sm:$0xff] %vm335, %v2555
        %2576 = vst.msk [vmem:[%s263 + $0x78] sm:$0xff] %vm335, %v2558
        %s2577 = sand.u32 %s164, 1
        %s2578 = scalar_lea.sflag [#allocation3], %s2577
        %s2579 = sand.u32 %s164, 1
        %s2580 = smul.addr %s2579, 128
        %s2581 = scalar_lea.vmem [#allocation2], %s2580
        // Predicated region
        $region45: #{structure_extractor.1} parent=43 // pred_check
          %p2582 = pneg %p174
        $region46: #{structure_extractor.1} parent=43 // pred_check_branch
          %2584 = sbr.rel (%p2582) target = $region48
        $region47: #{structure_extractor.1} parent=43 // pred_region
          %s2585 = smul.u32 8, %s20
          %s2587 = ssub.s32 2048, 2048
          %2588 = vsyncadd %s2578, %s2587
          %s2589 = smul.addr %s2585, 2
          %s2590 = smul.addr %s2589, 128
          %s2591 = scalar_lea.hbm %s6, %s2590
          %s2592 = sshll.u32 %s2581, 4
          %s2593 = int_to_ptr.vmem [resolvable:$true] %s2592
          %2598 = dma.vmem_to_hbm [thread:$0]  %s2593, 2048, %s2591, %s2578, 128, 128, 8
        $region48: #{structure_extractor.1} parent=43 // pred_fallthru
          _
      $region44: #{structure_extractor.1} parent=5 // pred_fallthru
        _
      %p2599 = scmp.le.s32.totalorder 2, %s15
      // Predicated region
      $region49: #{structure_extractor.1} parent=5 // pred_check
        %p2600 = pneg %p2599
      $region50: #{structure_extractor.1} parent=5 // pred_check_branch
        %2602 = sbr.rel (%p2600) target = $region52
      $region51: #{structure_extractor.1} parent=5 // pred_region
        %s2603 = ssub.s32 %s15, 2
        // Predicated region
        $region53: #{structure_extractor.1} parent=51 // pred_check
          %p2604 = pneg %p180
        $region54: #{structure_extractor.1} parent=51 // pred_check_branch
          %2606 = sbr.rel (%p2604) target = $region56
        $region55: #{structure_extractor.1} parent=51 // pred_region
          %s2607 = sand.u32 %s165, 1
          %s2608 = scalar_lea.sflag [#allocation3], %s2607
          %s2609 = sand.u32 %s165, 1
          %s2610 = smul.addr %s2609, 128
          %s2611 = scalar_lea.vmem [#allocation2], %s2610
          %2612 = dma.done %s2608, 2048
        $region56: #{structure_extractor.1} parent=51 // pred_fallthru
          _
      $region52: #{structure_extractor.1} parent=5 // pred_fallthru
        _
    $region6: #{structure_extractor.1} parent=1 // loop_footer
      %s19 = sadd.s32 1, %s15
    $region7: #{structure_extractor.1} parent=1 // loop_footer_branch
      %14 = sbr.rel target = $region3
    $region8: #{structure_extractor.1} parent=1 // loop_exit
      _
    %2613 = vsyncpa [#allocation3], 1
    %s2614 = scalar_lea.sflag [#allocation3], 1
    %2615 = vsyncpa %s2614, 1

</llo_original>
